<compile_context>
chip_gen: v5e
topology: v5e:2x2
jax: 0.10.0
libtpu: 0.0.40
codegen_flags: <defaults>
</compile_context>

<pallas_src>
import jax
import jax.numpy as jnp
from jax import lax
from jax.experimental import pallas as pl
from jax.experimental.pallas import tpu as pltpu


def _pair(v):
    return tuple(v) if isinstance(v, (tuple, list)) else (v, v)


def _round_up(x, m):
    return ((x + m - 1) // m) * m


def _torch_same_style_padding(H, W, Kh, Kw, Sh, Sw):
    padding_height = Kh - 1 - (Sh - (H - Kh) % Sh) % Sh
    padding_width = Kw - 1 - (Sw - (W - Kw) % Sw) % Sw
    pt = padding_height // 2
    pb = padding_height - pt
    pleft = padding_width // 2
    pright = padding_width - pleft
    return pt, pb, pleft, pright


def _block_configs(x_shape_nhwc, params, kernel_sizes, strides):
    """Static per-block geometry for the fused kernel."""
    N, H, W, C = x_shape_nhwc
    cfgs = []
    for (w, b), ks, st in zip(params, kernel_sizes, strides):
        Kh, Kw = ks
        Sh, Sw = st
        Cout = int(w.shape[0])
        assert int(w.shape[1]) == C, "channel mismatch between blocks"
        pt, pb, pleft, pright = _torch_same_style_padding(H, W, Kh, Kw, Sh, Sw)
        Hpd, Wpd = H + pt + pb, W + pleft + pright
        Ho = (Hpd - Kh) // Sh + 1
        Wo = (Wpd - Kw) // Sw + 1
        Hp, Wp = Ho // 2, Wo // 2                 # MaxPool2d(2,2), floor mode
        if Hp < 1 or Wp < 1:
            raise ValueError(f"pooled output collapses to zero size (Ho={Ho}, Wo={Wo})")
        # interior-copy geometry (negative padding == crop, matching F.pad)
        r0d, r0s = max(pt, 0), max(-pt, 0)
        nr = min(pt + H, Hpd) - r0d
        c0d, c0s = max(pleft, 0), max(-pleft, 0)
        nc = min(pleft + W, Wpd) - c0d
        if nr <= 0 or nc <= 0:
            raise ValueError("negative padding crops away the entire input")
        KKC = Kh * Kw * C
        cfgs.append(dict(
            H=H, W=W, Cin=C, Cout=Cout, Kh=Kh, Kw=Kw, Sh=Sh, Sw=Sw,
            pt=pt, pb=pb, pleft=pleft, pright=pright,
            Hpd=Hpd, Wpd=Wpd, Ho=Ho, Wo=Wo, Hp=Hp, Wp=Wp,
            r0d=r0d, r0s=r0s, nr=nr, c0d=c0d, c0s=c0s, nc=nc,
            KKC=KKC, KKCp=_round_up(KKC, 128), COp=_round_up(Cout, 128)))
        H, W, C = Hp, Wp, Cout
    return cfgs


def _rows_to_3d(y2d, Hsp, Wsp):
    """(Hsp*Wsp, C) -> (Hsp, Wsp, C) using only row slices + leading-axis stack
    (avoids relying on a sublane-splitting reshape in Mosaic)."""
    return jnp.stack([y2d[i * Wsp:(i + 1) * Wsp, :] for i in range(Hsp)], axis=0)


def _make_fused_kernel(cfgs):
    nb = len(cfgs)

    def kernel(*refs):
        x_ref = refs[0]                                   # (Hpd0, Wpd0, Cin0), pre-padded
        w_refs = [refs[1 + 2 * i] for i in range(nb)]     # (KKCp, COp) each
        b_refs = [refs[2 + 2 * i] for i in range(nb)]     # (1, COp) each
        o_ref = refs[1 + 2 * nb]                          # (Rf, Cout_last)
        xpad_refs = list(refs[2 + 2 * nb: 2 + 2 * nb + (nb - 1)])
        lhs_buf = refs[2 + 2 * nb + (nb - 1)]             # shared im2col scratch

        act2d = None   # previous block's pooled output, (Hp_prev*Wp_prev, COp_prev) f32
        for bi, c in enumerate(cfgs):
            Hp, Wp, Cin = c["Hp"], c["Wp"], c["Cin"]
            Kh, Kw, Sh, Sw = c["Kh"], c["Kw"], c["Sh"], c["Sw"]
            KKC, KKCp = c["KKC"], c["KKCp"]
            R = Hp * Wp

            if bi == 0:
                src = x_ref                               # already zero-padded on host
            else:
                src = xpad_refs[bi - 1]
                p = cfgs[bi - 1]
                Hpd, Wpd = c["Hpd"], c["Wpd"]
                r0d, r0s, nr = c["r0d"], c["r0s"], c["nr"]
                c0d, c0s, nc = c["c0d"], c["c0s"], c["nc"]

                # --- zero only the padding ring (skipped entirely if no padding) ---
                if r0d > 0:
                    src[0:r0d, :, :] = jnp.zeros((r0d, Wpd, Cin), src.dtype)
                if r0d + nr < Hpd:
                    src[r0d + nr:Hpd, :, :] = jnp.zeros(
                        (Hpd - r0d - nr, Wpd, Cin), src.dtype)
                if c0d > 0:
                    src[r0d:r0d + nr, 0:c0d, :] = jnp.zeros((nr, c0d, Cin), src.dtype)
                if c0d + nc < Wpd:
                    src[r0d:r0d + nr, c0d + nc:Wpd, :] = jnp.zeros(
                        (nr, Wpd - c0d - nc, Cin), src.dtype)

                # --- ONE bulk interior copy of the previous pooled activation ------
                act3 = _rows_to_3d(act2d, p["Hp"], p["Wp"])   # (Hp_prev, Wp_prev, COp_prev)
                src[r0d:r0d + nr, c0d:c0d + nc, :] = (
                    act3[r0s:r0s + nr, c0s:c0s + nc, :Cin].astype(src.dtype))

            # --- zero the lane-pad tail of the im2col scratch once per block --------
            if KKCp > KKC:
                lhs_buf[0:Hp, 0:Wp, KKC:KKCp] = jnp.zeros(
                    (Hp, Wp, KKCp - KKC), lhs_buf.dtype)

            # --- conv + 2x2/2 maxpool: one matmul per pool position, incremental max
            w_mat = w_refs[bi][...]
            y = None
            for dh in range(2):
                for dw in range(2):
                    for kh in range(Kh):
                        for kw in range(Kw):
                            off = (kh * Kw + kw) * Cin
                            slab = src[pl.ds(dh * Sh + kh, Hp, stride=2 * Sh),
                                       pl.ds(dw * Sw + kw, Wp, stride=2 * Sw), :]
                            lhs_buf[0:Hp, 0:Wp, off:off + Cin] = slab.astype(lhs_buf.dtype)
                    lhs = lhs_buf[0:Hp, 0:Wp, 0:KKCp].reshape(R, KKCp)
                    yp = jnp.dot(lhs, w_mat, preferred_element_type=jnp.float32)
                    y = yp if y is None else jnp.maximum(y, yp)
            act2d = y + b_refs[bi][...]        # bias after max (per-channel, monotonic)

        last = cfgs[-1]
        o_ref[...] = act2d[:, :last["Cout"]].astype(o_ref.dtype)

    return kernel


def _pad_or_crop_nhwc(x, pt, pb, pleft, pright):
    """F.pad-style padding where negative values crop, NHWC layout."""
    N, H, W, C = x.shape
    x = x[:, max(-pt, 0):H - max(-pb, 0), max(-pleft, 0):W - max(-pright, 0), :]
    return jnp.pad(x, ((0, 0), (max(pt, 0), max(pb, 0)),
                       (max(pleft, 0), max(pright, 0)), (0, 0)))


def _pad_or_crop_nchw(x, pt, pb, pleft, pright):
    N, C, H, W = x.shape
    x = x[:, :, max(-pt, 0):H - max(-pb, 0), max(-pleft, 0):W - max(-pright, 0)]
    return jnp.pad(x, ((0, 0), (0, 0), (max(pt, 0), max(pb, 0)),
                       (max(pleft, 0), max(pright, 0))))


def _vmem_estimate_bytes(cfgs, compute_dtype, out_rows, out_cols):
    """Static (8,128)-tile-padded VMEM footprint estimate for the fused kernel."""
    item = jnp.dtype(compute_dtype).itemsize
    c0 = cfgs[0]
    est = 2 * c0["Hpd"] * _round_up(c0["Wpd"], 8) * _round_up(c0["Cin"], 128) * 4
    for c in cfgs:
        est += 2 * _round_up(c["KKCp"], 8) * c["COp"] * item      # weights
        est += 2 * 8 * c["COp"] * 4                               # bias
    est += 2 * _round_up(out_rows, 8) * _round_up(out_cols, 128) * 4
    for c in cfgs[1:]:
        est += c["Hpd"] * _round_up(c["Wpd"], 8) * _round_up(c["Cin"], 128) * item
    kkcp_max = max(c["KKCp"] for c in cfgs)
    est += c0["Hp"] * _round_up(c0["Wp"], 8) * kkcp_max * item    # shared im2col scratch
    return est


def downsample_net(x_nchw, params, kernel_sizes, strides, compute_dtype=jnp.float32):
    """DownsampleNetBase.forward fused into one Pallas TPU kernel. NCHW in/out.

    `compute_dtype=jnp.bfloat16` halves im2col/weight VMEM and uses native-bf16 MXU
    passes (f32 accumulation kept via preferred_element_type); default f32 preserves
    1e-4 agreement with the f32 reference.
    """
    x = jnp.transpose(x_nchw, (0, 2, 3, 1)).astype(jnp.float32)   # NCHW -> NHWC
    N, H, W, C = x.shape
    cfgs = _block_configs((N, H, W, C), params, kernel_sizes, strides)
    c0 = cfgs[0]

    # Block-0 "same-style" padding (or crop for negative padding) done on the host.
    xp = _pad_or_crop_nhwc(x, c0["pt"], c0["pb"], c0["pleft"], c0["pright"])

    # Conv weights padded so the contraction dim and Cout are lane-dense; bias padded
    # to the same Cout. Zero rows/cols do not change the result.
    flat_params = []
    in_specs = [pl.BlockSpec((None, c0["Hpd"], c0["Wpd"], c0["Cin"]),
                             lambda n: (n, 0, 0, 0))]
    for (w, b), c in zip(params, cfgs):
        # PyTorch (Cout, Cin, Kh, Kw) -> (Kh*Kw*Cin, Cout), matching patch lane order.
        w_mat = jnp.transpose(w, (2, 3, 1, 0)).reshape(c["KKC"], c["Cout"])
        w_pad = jnp.zeros((c["KKCp"], c["COp"]), compute_dtype)
        w_pad = w_pad.at[:c["KKC"], :c["Cout"]].set(w_mat.astype(compute_dtype))
        b_pad = jnp.zeros((1, c["COp"]), jnp.float32)
        b_pad = b_pad.at[0, :c["Cout"]].set(b.astype(jnp.float32))
        flat_params += [w_pad, b_pad]
        in_specs += [pl.BlockSpec((c["KKCp"], c["COp"]), lambda n: (0, 0)),
                     pl.BlockSpec((1, c["COp"]), lambda n: (0, 0))]

    last = cfgs[-1]
    Rf, Coutf = last["Hp"] * last["Wp"], last["Cout"]

    # Per-block padded-activation scratches (blocks >= 1) + ONE shared im2col scratch
    # sized for the largest block (block 0 has the largest pooled grid).
    scratch_shapes = [pltpu.VMEM((c["Hpd"], c["Wpd"], c["Cin"]), compute_dtype)
                      for c in cfgs[1:]]
    kkcp_max = max(c["KKCp"] for c in cfgs)
    scratch_shapes.append(pltpu.VMEM((c0["Hp"], c0["Wp"], kkcp_max), compute_dtype))

    vmem_limit = int(max(_vmem_estimate_bytes(cfgs, compute_dtype, Rf, Coutf)
                         + (2 << 20), 16 << 20))

    out = pl.pallas_call(
        _make_fused_kernel(cfgs),
        out_shape=jax.ShapeDtypeStruct((N, Rf, Coutf), jnp.float32),
        grid=(N,),
        in_specs=in_specs,
        out_specs=pl.BlockSpec((None, Rf, Coutf), lambda n: (n, 0, 0)),
        scratch_shapes=scratch_shapes,
        compiler_params=pltpu.CompilerParams(
            dimension_semantics=("parallel",),
            vmem_limit_bytes=vmem_limit),
    )(xp, *flat_params)

    out = out.reshape(N, last["Hp"], last["Wp"], Coutf)
    return jnp.transpose(out, (0, 3, 1, 2))               # NHWC -> NCHW


def make_params(key, channels, kernel_sizes):
    """Deterministic Conv2d-style (kaiming-uniform-like) params for each block."""
    params = []
    for n in range(len(channels) - 1):
        Kh, Kw = kernel_sizes[n]
        cin, cout = channels[n], channels[n + 1]
        key, k1, k2 = jax.random.split(key, 3)
        fan_in = cin * Kh * Kw
        bound = 1.0 / (fan_in ** 0.5)
        w = jax.random.uniform(k1, (cout, cin, Kh, Kw), jnp.float32, -bound, bound)
        b = jax.random.uniform(k2, (cout,), jnp.float32, -bound, bound)
        params.append((w, b))
    return params


def reference_net(x_nchw, params, kernel_sizes, strides):
    """Pure-JAX reference (lax conv + reduce_window); handles negative padding as crop."""
    x = x_nchw
    for (w, b), (Kh, Kw), (Sh, Sw) in zip(params, kernel_sizes, strides):
        _, _, H, W = x.shape
        pt, pb, pleft, pright = _torch_same_style_padding(H, W, Kh, Kw, Sh, Sw)
        xp = _pad_or_crop_nchw(x, pt, pb, pleft, pright)
        y = lax.conv_general_dilated(
            xp, w, window_strides=(Sh, Sw), padding="VALID",
            dimension_numbers=("NCHW", "OIHW", "NCHW"))
        y = y + b[None, :, None, None]
        y = lax.reduce_window(y, -jnp.inf, lax.max,
                              (1, 1, 2, 2), (1, 1, 2, 2), "VALID")
        x = y
    return x


if __name__ == "__main__":
    # DownsampleNetBase(channels=[4, 8, 16], kernel_size=3, stride=2, pool='max')
    channels = [4, 8, 16]
    kernel_size = 3
    stride = 2
    n_blocks = len(channels) - 1
    kernel_sizes = [_pair(kernel_size)] * n_blocks
    strides = [_pair(stride)] * n_blocks

    key = jax.random.PRNGKey(0)
    kx, kp = jax.random.split(key)
    x = jax.random.normal(kx, (2, 4, 16, 16), jnp.float32)   # (N, C, H, W)
    params = make_params(kp, channels, kernel_sizes)

    out = downsample_net(x, params, kernel_sizes, strides)
    out = jax.block_until_ready(out)

    ref = reference_net(x, params, kernel_sizes, strides)
    assert out.shape == ref.shape, (out.shape, ref.shape)
    err = float(jnp.max(jnp.abs(out - ref)))
    assert jnp.allclose(out, ref, atol=1e-4, rtol=1e-4), f"max abs err {err}"
    print("KERNEL_OK")
</pallas_src>

<mosaic_0001>
module attributes {stable_mosaic.version = 11 : i64} {
  func.func @kernel(%arg0: i32, %arg1: memref<1x17x17x4xf32, #tpu.memory_space<vmem>>, %arg2: memref<128x128xf32, #tpu.memory_space<vmem>>, %arg3: memref<1x128xf32, #tpu.memory_space<vmem>>, %arg4: memref<128x128xf32, #tpu.memory_space<vmem>>, %arg5: memref<1x128xf32, #tpu.memory_space<vmem>>, %arg6: memref<1x1x16xf32, #tpu.memory_space<vmem>>, %arg7: memref<5x5x8xf32, #tpu.memory_space<vmem>>, %arg8: memref<4x4x128xf32, #tpu.memory_space<vmem>>) attributes {dimension_semantics = [#tpu.dimension_semantics<parallel>], iteration_bounds = array<i64: 2>, scalar_prefetch = 0 : i64, scratch_operands = 2 : i64, tpu.core_type = #tpu.core_type<tc>, window_params = [{transform_indices = @transform_0, window_bounds = array<i64: 1, 17, 17, 4>}, {pipeline_mode = #tpu.pipeline_mode<synchronous>, transform_indices = @transform_1, window_bounds = array<i64: 128, 128>}, {pipeline_mode = #tpu.pipeline_mode<synchronous>, transform_indices = @transform_2, window_bounds = array<i64: 1, 128>}, {pipeline_mode = #tpu.pipeline_mode<synchronous>, transform_indices = @transform_3, window_bounds = array<i64: 128, 128>}, {pipeline_mode = #tpu.pipeline_mode<synchronous>, transform_indices = @transform_4, window_bounds = array<i64: 1, 128>}, {transform_indices = @transform_5, window_bounds = array<i64: 1, 1, 16>}]} {
    %cst = arith.constant 0.000000e+00 : f32
    %0 = vector.broadcast %cst : f32 to vector<4x4x92xf32>
    %c0 = arith.constant 0 : index
    %c0_0 = arith.constant 0 : index
    %c36 = arith.constant 36 : index
    %1 = vector.load %arg8[%c0, %c0_0, %c36] : memref<4x4x128xf32, #tpu.memory_space<vmem>>, vector<4x4x92xf32>
    tpu.vector_store %arg8[%c0, %c0_0, %c36], %0 {strides = array<i32>} : memref<4x4x128xf32, #tpu.memory_space<vmem>>, vector<4x4x92xf32>,
    %c0_1 = arith.constant 0 : index
    %c0_2 = arith.constant 0 : index
    %2 = vector.load %arg2[%c0_1, %c0_2] : memref<128x128xf32, #tpu.memory_space<vmem>>, vector<128x128xf32>
    %c0_3 = arith.constant 0 : index
    %c0_4 = arith.constant 0 : index
    %c0_5 = arith.constant 0 : index
    %c0_6 = arith.constant 0 : index
    %3 = tpu.strided_load %arg1[%c0_3, %c0_4, %c0_5, %c0_6] {strides = array<i32: 1, 4, 4, 1>} : memref<1x17x17x4xf32, #tpu.memory_space<vmem>>, vector<1x4x4x4xf32>
    %4 = vector.shape_cast %3 : vector<1x4x4x4xf32> to vector<4x4x4xf32>
    %c0_7 = arith.constant 0 : index
    %c0_8 = arith.constant 0 : index
    %c0_9 = arith.constant 0 : index
    %5 = vector.load %arg8[%c0_7, %c0_8, %c0_9] : memref<4x4x128xf32, #tpu.memory_space<vmem>>, vector<4x4x4xf32>
    tpu.vector_store %arg8[%c0_7, %c0_8, %c0_9], %4 {strides = array<i32>} : memref<4x4x128xf32, #tpu.memory_space<vmem>>, vector<4x4x4xf32>,
    %c0_10 = arith.constant 0 : index
    %c0_11 = arith.constant 0 : index
    %c1 = arith.constant 1 : index
    %c0_12 = arith.constant 0 : index
    %6 = tpu.strided_load %arg1[%c0_10, %c0_11, %c1, %c0_12] {strides = array<i32: 1, 4, 4, 1>} : memref<1x17x17x4xf32, #tpu.memory_space<vmem>>, vector<1x4x4x4xf32>
    %7 = vector.shape_cast %6 : vector<1x4x4x4xf32> to vector<4x4x4xf32>
    %c0_13 = arith.constant 0 : index
    %c0_14 = arith.constant 0 : index
    %c4 = arith.constant 4 : index
    %8 = vector.load %arg8[%c0_13, %c0_14, %c4] : memref<4x4x128xf32, #tpu.memory_space<vmem>>, vector<4x4x4xf32>
    tpu.vector_store %arg8[%c0_13, %c0_14, %c4], %7 {strides = array<i32>} : memref<4x4x128xf32, #tpu.memory_space<vmem>>, vector<4x4x4xf32>,
    %c0_15 = arith.constant 0 : index
    %c0_16 = arith.constant 0 : index
    %c2 = arith.constant 2 : index
    %c0_17 = arith.constant 0 : index
    %9 = tpu.strided_load %arg1[%c0_15, %c0_16, %c2, %c0_17] {strides = array<i32: 1, 4, 4, 1>} : memref<1x17x17x4xf32, #tpu.memory_space<vmem>>, vector<1x4x4x4xf32>
    %10 = vector.shape_cast %9 : vector<1x4x4x4xf32> to vector<4x4x4xf32>
    %c0_18 = arith.constant 0 : index
    %c0_19 = arith.constant 0 : index
    %c8 = arith.constant 8 : index
    %11 = vector.load %arg8[%c0_18, %c0_19, %c8] : memref<4x4x128xf32, #tpu.memory_space<vmem>>, vector<4x4x4xf32>
    tpu.vector_store %arg8[%c0_18, %c0_19, %c8], %10 {strides = array<i32>} : memref<4x4x128xf32, #tpu.memory_space<vmem>>, vector<4x4x4xf32>,
    %c0_20 = arith.constant 0 : index
    %c1_21 = arith.constant 1 : index
    %c0_22 = arith.constant 0 : index
    %c0_23 = arith.constant 0 : index
    %12 = tpu.strided_load %arg1[%c0_20, %c1_21, %c0_22, %c0_23] {strides = array<i32: 1, 4, 4, 1>} : memref<1x17x17x4xf32, #tpu.memory_space<vmem>>, vector<1x4x4x4xf32>
    %13 = vector.shape_cast %12 : vector<1x4x4x4xf32> to vector<4x4x4xf32>
    %c0_24 = arith.constant 0 : index
    %c0_25 = arith.constant 0 : index
    %c12 = arith.constant 12 : index
    %14 = vector.load %arg8[%c0_24, %c0_25, %c12] : memref<4x4x128xf32, #tpu.memory_space<vmem>>, vector<4x4x4xf32>
    tpu.vector_store %arg8[%c0_24, %c0_25, %c12], %13 {strides = array<i32>} : memref<4x4x128xf32, #tpu.memory_space<vmem>>, vector<4x4x4xf32>,
    %c0_26 = arith.constant 0 : index
    %c1_27 = arith.constant 1 : index
    %c1_28 = arith.constant 1 : index
    %c0_29 = arith.constant 0 : index
    %15 = tpu.strided_load %arg1[%c0_26, %c1_27, %c1_28, %c0_29] {strides = array<i32: 1, 4, 4, 1>} : memref<1x17x17x4xf32, #tpu.memory_space<vmem>>, vector<1x4x4x4xf32>
    %16 = vector.shape_cast %15 : vector<1x4x4x4xf32> to vector<4x4x4xf32>
    %c0_30 = arith.constant 0 : index
    %c0_31 = arith.constant 0 : index
    %c16 = arith.constant 16 : index
    %17 = vector.load %arg8[%c0_30, %c0_31, %c16] : memref<4x4x128xf32, #tpu.memory_space<vmem>>, vector<4x4x4xf32>
    tpu.vector_store %arg8[%c0_30, %c0_31, %c16], %16 {strides = array<i32>} : memref<4x4x128xf32, #tpu.memory_space<vmem>>, vector<4x4x4xf32>,
    %c0_32 = arith.constant 0 : index
    %c1_33 = arith.constant 1 : index
    %c2_34 = arith.constant 2 : index
    %c0_35 = arith.constant 0 : index
    %18 = tpu.strided_load %arg1[%c0_32, %c1_33, %c2_34, %c0_35] {strides = array<i32: 1, 4, 4, 1>} : memref<1x17x17x4xf32, #tpu.memory_space<vmem>>, vector<1x4x4x4xf32>
    %19 = vector.shape_cast %18 : vector<1x4x4x4xf32> to vector<4x4x4xf32>
    %c0_36 = arith.constant 0 : index
    %c0_37 = arith.constant 0 : index
    %c20 = arith.constant 20 : index
    %20 = vector.load %arg8[%c0_36, %c0_37, %c20] : memref<4x4x128xf32, #tpu.memory_space<vmem>>, vector<4x4x4xf32>
    tpu.vector_store %arg8[%c0_36, %c0_37, %c20], %19 {strides = array<i32>} : memref<4x4x128xf32, #tpu.memory_space<vmem>>, vector<4x4x4xf32>,
    %c0_38 = arith.constant 0 : index
    %c2_39 = arith.constant 2 : index
    %c0_40 = arith.constant 0 : index
    %c0_41 = arith.constant 0 : index
    %21 = tpu.strided_load %arg1[%c0_38, %c2_39, %c0_40, %c0_41] {strides = array<i32: 1, 4, 4, 1>} : memref<1x17x17x4xf32, #tpu.memory_space<vmem>>, vector<1x4x4x4xf32>
    %22 = vector.shape_cast %21 : vector<1x4x4x4xf32> to vector<4x4x4xf32>
    %c0_42 = arith.constant 0 : index
    %c0_43 = arith.constant 0 : index
    %c24 = arith.constant 24 : index
    %23 = vector.load %arg8[%c0_42, %c0_43, %c24] : memref<4x4x128xf32, #tpu.memory_space<vmem>>, vector<4x4x4xf32>
    tpu.vector_store %arg8[%c0_42, %c0_43, %c24], %22 {strides = array<i32>} : memref<4x4x128xf32, #tpu.memory_space<vmem>>, vector<4x4x4xf32>,
    %c0_44 = arith.constant 0 : index
    %c2_45 = arith.constant 2 : index
    %c1_46 = arith.constant 1 : index
    %c0_47 = arith.constant 0 : index
    %24 = tpu.strided_load %arg1[%c0_44, %c2_45, %c1_46, %c0_47] {strides = array<i32: 1, 4, 4, 1>} : memref<1x17x17x4xf32, #tpu.memory_space<vmem>>, vector<1x4x4x4xf32>
    %25 = vector.shape_cast %24 : vector<1x4x4x4xf32> to vector<4x4x4xf32>
    %c0_48 = arith.constant 0 : index
    %c0_49 = arith.constant 0 : index
    %c28 = arith.constant 28 : index
    %26 = vector.load %arg8[%c0_48, %c0_49, %c28] : memref<4x4x128xf32, #tpu.memory_space<vmem>>, vector<4x4x4xf32>
    tpu.vector_store %arg8[%c0_48, %c0_49, %c28], %25 {strides = array<i32>} : memref<4x4x128xf32, #tpu.memory_space<vmem>>, vector<4x4x4xf32>,
    %c0_50 = arith.constant 0 : index
    %c2_51 = arith.constant 2 : index
    %c2_52 = arith.constant 2 : index
    %c0_53 = arith.constant 0 : index
    %27 = tpu.strided_load %arg1[%c0_50, %c2_51, %c2_52, %c0_53] {strides = array<i32: 1, 4, 4, 1>} : memref<1x17x17x4xf32, #tpu.memory_space<vmem>>, vector<1x4x4x4xf32>
    %28 = vector.shape_cast %27 : vector<1x4x4x4xf32> to vector<4x4x4xf32>
    %c0_54 = arith.constant 0 : index
    %c0_55 = arith.constant 0 : index
    %c32 = arith.constant 32 : index
    %29 = vector.load %arg8[%c0_54, %c0_55, %c32] : memref<4x4x128xf32, #tpu.memory_space<vmem>>, vector<4x4x4xf32>
    tpu.vector_store %arg8[%c0_54, %c0_55, %c32], %28 {strides = array<i32>} : memref<4x4x128xf32, #tpu.memory_space<vmem>>, vector<4x4x4xf32>,
    %c0_56 = arith.constant 0 : index
    %c0_57 = arith.constant 0 : index
    %c0_58 = arith.constant 0 : index
    %30 = vector.load %arg8[%c0_56, %c0_57, %c0_58] : memref<4x4x128xf32, #tpu.memory_space<vmem>>, vector<4x4x128xf32>
    %31 = vector.shape_cast %30 : vector<4x4x128xf32> to vector<16x128xf32>
    %cst_59 = arith.constant dense<0.000000e+00> : vector<16x128xf32>
    %32 = tpu.matmul %31, %2, %cst_59 {dimension_numbers = #tpu.dot_dimension_numbers<[1], [0], [0], [1], [0, 0, 1, 1], [], []>} : vector<16x128xf32>, vector<128x128xf32>, vector<16x128xf32> -> vector<16x128xf32>
    %c0_60 = arith.constant 0 : index
    %c0_61 = arith.constant 0 : index
    %c2_62 = arith.constant 2 : index
    %c0_63 = arith.constant 0 : index
    %33 = tpu.strided_load %arg1[%c0_60, %c0_61, %c2_62, %c0_63] {strides = array<i32: 1, 4, 4, 1>} : memref<1x17x17x4xf32, #tpu.memory_space<vmem>>, vector<1x4x4x4xf32>
    %34 = vector.shape_cast %33 : vector<1x4x4x4xf32> to vector<4x4x4xf32>
    %c0_64 = arith.constant 0 : index
    %c0_65 = arith.constant 0 : index
    %c0_66 = arith.constant 0 : index
    %35 = vector.load %arg8[%c0_64, %c0_65, %c0_66] : memref<4x4x128xf32, #tpu.memory_space<vmem>>, vector<4x4x4xf32>
    tpu.vector_store %arg8[%c0_64, %c0_65, %c0_66], %34 {strides = array<i32>} : memref<4x4x128xf32, #tpu.memory_space<vmem>>, vector<4x4x4xf32>,
    %c0_67 = arith.constant 0 : index
    %c0_68 = arith.constant 0 : index
    %c3 = arith.constant 3 : index
    %c0_69 = arith.constant 0 : index
    %36 = tpu.strided_load %arg1[%c0_67, %c0_68, %c3, %c0_69] {strides = array<i32: 1, 4, 4, 1>} : memref<1x17x17x4xf32, #tpu.memory_space<vmem>>, vector<1x4x4x4xf32>
    %37 = vector.shape_cast %36 : vector<1x4x4x4xf32> to vector<4x4x4xf32>
    %c0_70 = arith.constant 0 : index
    %c0_71 = arith.constant 0 : index
    %c4_72 = arith.constant 4 : index
    %38 = vector.load %arg8[%c0_70, %c0_71, %c4_72] : memref<4x4x128xf32, #tpu.memory_space<vmem>>, vector<4x4x4xf32>
    tpu.vector_store %arg8[%c0_70, %c0_71, %c4_72], %37 {strides = array<i32>} : memref<4x4x128xf32, #tpu.memory_space<vmem>>, vector<4x4x4xf32>,
    %c0_73 = arith.constant 0 : index
    %c0_74 = arith.constant 0 : index
    %c4_75 = arith.constant 4 : index
    %c0_76 = arith.constant 0 : index
    %39 = tpu.strided_load %arg1[%c0_73, %c0_74, %c4_75, %c0_76] {strides = array<i32: 1, 4, 4, 1>} : memref<1x17x17x4xf32, #tpu.memory_space<vmem>>, vector<1x4x4x4xf32>
    %40 = vector.shape_cast %39 : vector<1x4x4x4xf32> to vector<4x4x4xf32>
    %c0_77 = arith.constant 0 : index
    %c0_78 = arith.constant 0 : index
    %c8_79 = arith.constant 8 : index
    %41 = vector.load %arg8[%c0_77, %c0_78, %c8_79] : memref<4x4x128xf32, #tpu.memory_space<vmem>>, vector<4x4x4xf32>
    tpu.vector_store %arg8[%c0_77, %c0_78, %c8_79], %40 {strides = array<i32>} : memref<4x4x128xf32, #tpu.memory_space<vmem>>, vector<4x4x4xf32>,
    %c0_80 = arith.constant 0 : index
    %c1_81 = arith.constant 1 : index
    %c2_82 = arith.constant 2 : index
    %c0_83 = arith.constant 0 : index
    %42 = tpu.strided_load %arg1[%c0_80, %c1_81, %c2_82, %c0_83] {strides = array<i32: 1, 4, 4, 1>} : memref<1x17x17x4xf32, #tpu.memory_space<vmem>>, vector<1x4x4x4xf32>
    %43 = vector.shape_cast %42 : vector<1x4x4x4xf32> to vector<4x4x4xf32>
    %c0_84 = arith.constant 0 : index
    %c0_85 = arith.constant 0 : index
    %c12_86 = arith.constant 12 : index
    %44 = vector.load %arg8[%c0_84, %c0_85, %c12_86] : memref<4x4x128xf32, #tpu.memory_space<vmem>>, vector<4x4x4xf32>
    tpu.vector_store %arg8[%c0_84, %c0_85, %c12_86], %43 {strides = array<i32>} : memref<4x4x128xf32, #tpu.memory_space<vmem>>, vector<4x4x4xf32>,
    %c0_87 = arith.constant 0 : index
    %c1_88 = arith.constant 1 : index
    %c3_89 = arith.constant 3 : index
    %c0_90 = arith.constant 0 : index
    %45 = tpu.strided_load %arg1[%c0_87, %c1_88, %c3_89, %c0_90] {strides = array<i32: 1, 4, 4, 1>} : memref<1x17x17x4xf32, #tpu.memory_space<vmem>>, vector<1x4x4x4xf32>
    %46 = vector.shape_cast %45 : vector<1x4x4x4xf32> to vector<4x4x4xf32>
    %c0_91 = arith.constant 0 : index
    %c0_92 = arith.constant 0 : index
    %c16_93 = arith.constant 16 : index
    %47 = vector.load %arg8[%c0_91, %c0_92, %c16_93] : memref<4x4x128xf32, #tpu.memory_space<vmem>>, vector<4x4x4xf32>
    tpu.vector_store %arg8[%c0_91, %c0_92, %c16_93], %46 {strides = array<i32>} : memref<4x4x128xf32, #tpu.memory_space<vmem>>, vector<4x4x4xf32>,
    %c0_94 = arith.constant 0 : index
    %c1_95 = arith.constant 1 : index
    %c4_96 = arith.constant 4 : index
    %c0_97 = arith.constant 0 : index
    %48 = tpu.strided_load %arg1[%c0_94, %c1_95, %c4_96, %c0_97] {strides = array<i32: 1, 4, 4, 1>} : memref<1x17x17x4xf32, #tpu.memory_space<vmem>>, vector<1x4x4x4xf32>
    %49 = vector.shape_cast %48 : vector<1x4x4x4xf32> to vector<4x4x4xf32>
    %c0_98 = arith.constant 0 : index
    %c0_99 = arith.constant 0 : index
    %c20_100 = arith.constant 20 : index
    %50 = vector.load %arg8[%c0_98, %c0_99, %c20_100] : memref<4x4x128xf32, #tpu.memory_space<vmem>>, vector<4x4x4xf32>
    tpu.vector_store %arg8[%c0_98, %c0_99, %c20_100], %49 {strides = array<i32>} : memref<4x4x128xf32, #tpu.memory_space<vmem>>, vector<4x4x4xf32>,
    %c0_101 = arith.constant 0 : index
    %c2_102 = arith.constant 2 : index
    %c2_103 = arith.constant 2 : index
    %c0_104 = arith.constant 0 : index
    %51 = tpu.strided_load %arg1[%c0_101, %c2_102, %c2_103, %c0_104] {strides = array<i32: 1, 4, 4, 1>} : memref<1x17x17x4xf32, #tpu.memory_space<vmem>>, vector<1x4x4x4xf32>
    %52 = vector.shape_cast %51 : vector<1x4x4x4xf32> to vector<4x4x4xf32>
    %c0_105 = arith.constant 0 : index
    %c0_106 = arith.constant 0 : index
    %c24_107 = arith.constant 24 : index
    %53 = vector.load %arg8[%c0_105, %c0_106, %c24_107] : memref<4x4x128xf32, #tpu.memory_space<vmem>>, vector<4x4x4xf32>
    tpu.vector_store %arg8[%c0_105, %c0_106, %c24_107], %52 {strides = array<i32>} : memref<4x4x128xf32, #tpu.memory_space<vmem>>, vector<4x4x4xf32>,
    %c0_108 = arith.constant 0 : index
    %c2_109 = arith.constant 2 : index
    %c3_110 = arith.constant 3 : index
    %c0_111 = arith.constant 0 : index
    %54 = tpu.strided_load %arg1[%c0_108, %c2_109, %c3_110, %c0_111] {strides = array<i32: 1, 4, 4, 1>} : memref<1x17x17x4xf32, #tpu.memory_space<vmem>>, vector<1x4x4x4xf32>
    %55 = vector.shape_cast %54 : vector<1x4x4x4xf32> to vector<4x4x4xf32>
    %c0_112 = arith.constant 0 : index
    %c0_113 = arith.constant 0 : index
    %c28_114 = arith.constant 28 : index
    %56 = vector.load %arg8[%c0_112, %c0_113, %c28_114] : memref<4x4x128xf32, #tpu.memory_space<vmem>>, vector<4x4x4xf32>
    tpu.vector_store %arg8[%c0_112, %c0_113, %c28_114], %55 {strides = array<i32>} : memref<4x4x128xf32, #tpu.memory_space<vmem>>, vector<4x4x4xf32>,
    %c0_115 = arith.constant 0 : index
    %c2_116 = arith.constant 2 : index
    %c4_117 = arith.constant 4 : index
    %c0_118 = arith.constant 0 : index
    %57 = tpu.strided_load %arg1[%c0_115, %c2_116, %c4_117, %c0_118] {strides = array<i32: 1, 4, 4, 1>} : memref<1x17x17x4xf32, #tpu.memory_space<vmem>>, vector<1x4x4x4xf32>
    %58 = vector.shape_cast %57 : vector<1x4x4x4xf32> to vector<4x4x4xf32>
    %c0_119 = arith.constant 0 : index
    %c0_120 = arith.constant 0 : index
    %c32_121 = arith.constant 32 : index
    %59 = vector.load %arg8[%c0_119, %c0_120, %c32_121] : memref<4x4x128xf32, #tpu.memory_space<vmem>>, vector<4x4x4xf32>
    tpu.vector_store %arg8[%c0_119, %c0_120, %c32_121], %58 {strides = array<i32>} : memref<4x4x128xf32, #tpu.memory_space<vmem>>, vector<4x4x4xf32>,
    %c0_122 = arith.constant 0 : index
    %c0_123 = arith.constant 0 : index
    %c0_124 = arith.constant 0 : index
    %60 = vector.load %arg8[%c0_122, %c0_123, %c0_124] : memref<4x4x128xf32, #tpu.memory_space<vmem>>, vector<4x4x128xf32>
    %61 = vector.shape_cast %60 : vector<4x4x128xf32> to vector<16x128xf32>
    %cst_125 = arith.constant dense<0.000000e+00> : vector<16x128xf32>
    %62 = tpu.matmul %61, %2, %cst_125 {dimension_numbers = #tpu.dot_dimension_numbers<[1], [0], [0], [1], [0, 0, 1, 1], [], []>} : vector<16x128xf32>, vector<128x128xf32>, vector<16x128xf32> -> vector<16x128xf32>
    %63 = arith.maximumf %32, %62 : vector<16x128xf32>
    %c0_126 = arith.constant 0 : index
    %c2_127 = arith.constant 2 : index
    %c0_128 = arith.constant 0 : index
    %c0_129 = arith.constant 0 : index
    %64 = tpu.strided_load %arg1[%c0_126, %c2_127, %c0_128, %c0_129] {strides = array<i32: 1, 4, 4, 1>} : memref<1x17x17x4xf32, #tpu.memory_space<vmem>>, vector<1x4x4x4xf32>
    %65 = vector.shape_cast %64 : vector<1x4x4x4xf32> to vector<4x4x4xf32>
    %c0_130 = arith.constant 0 : index
    %c0_131 = arith.constant 0 : index
    %c0_132 = arith.constant 0 : index
    %66 = vector.load %arg8[%c0_130, %c0_131, %c0_132] : memref<4x4x128xf32, #tpu.memory_space<vmem>>, vector<4x4x4xf32>
    tpu.vector_store %arg8[%c0_130, %c0_131, %c0_132], %65 {strides = array<i32>} : memref<4x4x128xf32, #tpu.memory_space<vmem>>, vector<4x4x4xf32>,
    %c0_133 = arith.constant 0 : index
    %c2_134 = arith.constant 2 : index
    %c1_135 = arith.constant 1 : index
    %c0_136 = arith.constant 0 : index
    %67 = tpu.strided_load %arg1[%c0_133, %c2_134, %c1_135, %c0_136] {strides = array<i32: 1, 4, 4, 1>} : memref<1x17x17x4xf32, #tpu.memory_space<vmem>>, vector<1x4x4x4xf32>
    %68 = vector.shape_cast %67 : vector<1x4x4x4xf32> to vector<4x4x4xf32>
    %c0_137 = arith.constant 0 : index
    %c0_138 = arith.constant 0 : index
    %c4_139 = arith.constant 4 : index
    %69 = vector.load %arg8[%c0_137, %c0_138, %c4_139] : memref<4x4x128xf32, #tpu.memory_space<vmem>>, vector<4x4x4xf32>
    tpu.vector_store %arg8[%c0_137, %c0_138, %c4_139], %68 {strides = array<i32>} : memref<4x4x128xf32, #tpu.memory_space<vmem>>, vector<4x4x4xf32>,
    %c0_140 = arith.constant 0 : index
    %c2_141 = arith.constant 2 : index
    %c2_142 = arith.constant 2 : index
    %c0_143 = arith.constant 0 : index
    %70 = tpu.strided_load %arg1[%c0_140, %c2_141, %c2_142, %c0_143] {strides = array<i32: 1, 4, 4, 1>} : memref<1x17x17x4xf32, #tpu.memory_space<vmem>>, vector<1x4x4x4xf32>
    %71 = vector.shape_cast %70 : vector<1x4x4x4xf32> to vector<4x4x4xf32>
    %c0_144 = arith.constant 0 : index
    %c0_145 = arith.constant 0 : index
    %c8_146 = arith.constant 8 : index
    %72 = vector.load %arg8[%c0_144, %c0_145, %c8_146] : memref<4x4x128xf32, #tpu.memory_space<vmem>>, vector<4x4x4xf32>
    tpu.vector_store %arg8[%c0_144, %c0_145, %c8_146], %71 {strides = array<i32>} : memref<4x4x128xf32, #tpu.memory_space<vmem>>, vector<4x4x4xf32>,
    %c0_147 = arith.constant 0 : index
    %c3_148 = arith.constant 3 : index
    %c0_149 = arith.constant 0 : index
    %c0_150 = arith.constant 0 : index
    %73 = tpu.strided_load %arg1[%c0_147, %c3_148, %c0_149, %c0_150] {strides = array<i32: 1, 4, 4, 1>} : memref<1x17x17x4xf32, #tpu.memory_space<vmem>>, vector<1x4x4x4xf32>
    %74 = vector.shape_cast %73 : vector<1x4x4x4xf32> to vector<4x4x4xf32>
    %c0_151 = arith.constant 0 : index
    %c0_152 = arith.constant 0 : index
    %c12_153 = arith.constant 12 : index
    %75 = vector.load %arg8[%c0_151, %c0_152, %c12_153] : memref<4x4x128xf32, #tpu.memory_space<vmem>>, vector<4x4x4xf32>
    tpu.vector_store %arg8[%c0_151, %c0_152, %c12_153], %74 {strides = array<i32>} : memref<4x4x128xf32, #tpu.memory_space<vmem>>, vector<4x4x4xf32>,
    %c0_154 = arith.constant 0 : index
    %c3_155 = arith.constant 3 : index
    %c1_156 = arith.constant 1 : index
    %c0_157 = arith.constant 0 : index
    %76 = tpu.strided_load %arg1[%c0_154, %c3_155, %c1_156, %c0_157] {strides = array<i32: 1, 4, 4, 1>} : memref<1x17x17x4xf32, #tpu.memory_space<vmem>>, vector<1x4x4x4xf32>
    %77 = vector.shape_cast %76 : vector<1x4x4x4xf32> to vector<4x4x4xf32>
    %c0_158 = arith.constant 0 : index
    %c0_159 = arith.constant 0 : index
    %c16_160 = arith.constant 16 : index
    %78 = vector.load %arg8[%c0_158, %c0_159, %c16_160] : memref<4x4x128xf32, #tpu.memory_space<vmem>>, vector<4x4x4xf32>
    tpu.vector_store %arg8[%c0_158, %c0_159, %c16_160], %77 {strides = array<i32>} : memref<4x4x128xf32, #tpu.memory_space<vmem>>, vector<4x4x4xf32>,
    %c0_161 = arith.constant 0 : index
    %c3_162 = arith.constant 3 : index
    %c2_163 = arith.constant 2 : index
    %c0_164 = arith.constant 0 : index
    %79 = tpu.strided_load %arg1[%c0_161, %c3_162, %c2_163, %c0_164] {strides = array<i32: 1, 4, 4, 1>} : memref<1x17x17x4xf32, #tpu.memory_space<vmem>>, vector<1x4x4x4xf32>
    %80 = vector.shape_cast %79 : vector<1x4x4x4xf32> to vector<4x4x4xf32>
    %c0_165 = arith.constant 0 : index
    %c0_166 = arith.constant 0 : index
    %c20_167 = arith.constant 20 : index
    %81 = vector.load %arg8[%c0_165, %c0_166, %c20_167] : memref<4x4x128xf32, #tpu.memory_space<vmem>>, vector<4x4x4xf32>
    tpu.vector_store %arg8[%c0_165, %c0_166, %c20_167], %80 {strides = array<i32>} : memref<4x4x128xf32, #tpu.memory_space<vmem>>, vector<4x4x4xf32>,
    %c0_168 = arith.constant 0 : index
    %c4_169 = arith.constant 4 : index
    %c0_170 = arith.constant 0 : index
    %c0_171 = arith.constant 0 : index
    %82 = tpu.strided_load %arg1[%c0_168, %c4_169, %c0_170, %c0_171] {strides = array<i32: 1, 4, 4, 1>} : memref<1x17x17x4xf32, #tpu.memory_space<vmem>>, vector<1x4x4x4xf32>
    %83 = vector.shape_cast %82 : vector<1x4x4x4xf32> to vector<4x4x4xf32>
    %c0_172 = arith.constant 0 : index
    %c0_173 = arith.constant 0 : index
    %c24_174 = arith.constant 24 : index
    %84 = vector.load %arg8[%c0_172, %c0_173, %c24_174] : memref<4x4x128xf32, #tpu.memory_space<vmem>>, vector<4x4x4xf32>
    tpu.vector_store %arg8[%c0_172, %c0_173, %c24_174], %83 {strides = array<i32>} : memref<4x4x128xf32, #tpu.memory_space<vmem>>, vector<4x4x4xf32>,
    %c0_175 = arith.constant 0 : index
    %c4_176 = arith.constant 4 : index
    %c1_177 = arith.constant 1 : index
    %c0_178 = arith.constant 0 : index
    %85 = tpu.strided_load %arg1[%c0_175, %c4_176, %c1_177, %c0_178] {strides = array<i32: 1, 4, 4, 1>} : memref<1x17x17x4xf32, #tpu.memory_space<vmem>>, vector<1x4x4x4xf32>
    %86 = vector.shape_cast %85 : vector<1x4x4x4xf32> to vector<4x4x4xf32>
    %c0_179 = arith.constant 0 : index
    %c0_180 = arith.constant 0 : index
    %c28_181 = arith.constant 28 : index
    %87 = vector.load %arg8[%c0_179, %c0_180, %c28_181] : memref<4x4x128xf32, #tpu.memory_space<vmem>>, vector<4x4x4xf32>
    tpu.vector_store %arg8[%c0_179, %c0_180, %c28_181], %86 {strides = array<i32>} : memref<4x4x128xf32, #tpu.memory_space<vmem>>, vector<4x4x4xf32>,
    %c0_182 = arith.constant 0 : index
    %c4_183 = arith.constant 4 : index
    %c2_184 = arith.constant 2 : index
    %c0_185 = arith.constant 0 : index
    %88 = tpu.strided_load %arg1[%c0_182, %c4_183, %c2_184, %c0_185] {strides = array<i32: 1, 4, 4, 1>} : memref<1x17x17x4xf32, #tpu.memory_space<vmem>>, vector<1x4x4x4xf32>
    %89 = vector.shape_cast %88 : vector<1x4x4x4xf32> to vector<4x4x4xf32>
    %c0_186 = arith.constant 0 : index
    %c0_187 = arith.constant 0 : index
    %c32_188 = arith.constant 32 : index
    %90 = vector.load %arg8[%c0_186, %c0_187, %c32_188] : memref<4x4x128xf32, #tpu.memory_space<vmem>>, vector<4x4x4xf32>
    tpu.vector_store %arg8[%c0_186, %c0_187, %c32_188], %89 {strides = array<i32>} : memref<4x4x128xf32, #tpu.memory_space<vmem>>, vector<4x4x4xf32>,
    %c0_189 = arith.constant 0 : index
    %c0_190 = arith.constant 0 : index
    %c0_191 = arith.constant 0 : index
    %91 = vector.load %arg8[%c0_189, %c0_190, %c0_191] : memref<4x4x128xf32, #tpu.memory_space<vmem>>, vector<4x4x128xf32>
    %92 = vector.shape_cast %91 : vector<4x4x128xf32> to vector<16x128xf32>
    %cst_192 = arith.constant dense<0.000000e+00> : vector<16x128xf32>
    %93 = tpu.matmul %92, %2, %cst_192 {dimension_numbers = #tpu.dot_dimension_numbers<[1], [0], [0], [1], [0, 0, 1, 1], [], []>} : vector<16x128xf32>, vector<128x128xf32>, vector<16x128xf32> -> vector<16x128xf32>
    %94 = arith.maximumf %63, %93 : vector<16x128xf32>
    %c0_193 = arith.constant 0 : index
    %c2_194 = arith.constant 2 : index
    %c2_195 = arith.constant 2 : index
    %c0_196 = arith.constant 0 : index
    %95 = tpu.strided_load %arg1[%c0_193, %c2_194, %c2_195, %c0_196] {strides = array<i32: 1, 4, 4, 1>} : memref<1x17x17x4xf32, #tpu.memory_space<vmem>>, vector<1x4x4x4xf32>
    %96 = vector.shape_cast %95 : vector<1x4x4x4xf32> to vector<4x4x4xf32>
    %c0_197 = arith.constant 0 : index
    %c0_198 = arith.constant 0 : index
    %c0_199 = arith.constant 0 : index
    %97 = vector.load %arg8[%c0_197, %c0_198, %c0_199] : memref<4x4x128xf32, #tpu.memory_space<vmem>>, vector<4x4x4xf32>
    tpu.vector_store %arg8[%c0_197, %c0_198, %c0_199], %96 {strides = array<i32>} : memref<4x4x128xf32, #tpu.memory_space<vmem>>, vector<4x4x4xf32>,
    %c0_200 = arith.constant 0 : index
    %c2_201 = arith.constant 2 : index
    %c3_202 = arith.constant 3 : index
    %c0_203 = arith.constant 0 : index
    %98 = tpu.strided_load %arg1[%c0_200, %c2_201, %c3_202, %c0_203] {strides = array<i32: 1, 4, 4, 1>} : memref<1x17x17x4xf32, #tpu.memory_space<vmem>>, vector<1x4x4x4xf32>
    %99 = vector.shape_cast %98 : vector<1x4x4x4xf32> to vector<4x4x4xf32>
    %c0_204 = arith.constant 0 : index
    %c0_205 = arith.constant 0 : index
    %c4_206 = arith.constant 4 : index
    %100 = vector.load %arg8[%c0_204, %c0_205, %c4_206] : memref<4x4x128xf32, #tpu.memory_space<vmem>>, vector<4x4x4xf32>
    tpu.vector_store %arg8[%c0_204, %c0_205, %c4_206], %99 {strides = array<i32>} : memref<4x4x128xf32, #tpu.memory_space<vmem>>, vector<4x4x4xf32>,
    %c0_207 = arith.constant 0 : index
    %c2_208 = arith.constant 2 : index
    %c4_209 = arith.constant 4 : index
    %c0_210 = arith.constant 0 : index
    %101 = tpu.strided_load %arg1[%c0_207, %c2_208, %c4_209, %c0_210] {strides = array<i32: 1, 4, 4, 1>} : memref<1x17x17x4xf32, #tpu.memory_space<vmem>>, vector<1x4x4x4xf32>
    %102 = vector.shape_cast %101 : vector<1x4x4x4xf32> to vector<4x4x4xf32>
    %c0_211 = arith.constant 0 : index
    %c0_212 = arith.constant 0 : index
    %c8_213 = arith.constant 8 : index
    %103 = vector.load %arg8[%c0_211, %c0_212, %c8_213] : memref<4x4x128xf32, #tpu.memory_space<vmem>>, vector<4x4x4xf32>
    tpu.vector_store %arg8[%c0_211, %c0_212, %c8_213], %102 {strides = array<i32>} : memref<4x4x128xf32, #tpu.memory_space<vmem>>, vector<4x4x4xf32>,
    %c0_214 = arith.constant 0 : index
    %c3_215 = arith.constant 3 : index
    %c2_216 = arith.constant 2 : index
    %c0_217 = arith.constant 0 : index
    %104 = tpu.strided_load %arg1[%c0_214, %c3_215, %c2_216, %c0_217] {strides = array<i32: 1, 4, 4, 1>} : memref<1x17x17x4xf32, #tpu.memory_space<vmem>>, vector<1x4x4x4xf32>
    %105 = vector.shape_cast %104 : vector<1x4x4x4xf32> to vector<4x4x4xf32>
    %c0_218 = arith.constant 0 : index
    %c0_219 = arith.constant 0 : index
    %c12_220 = arith.constant 12 : index
    %106 = vector.load %arg8[%c0_218, %c0_219, %c12_220] : memref<4x4x128xf32, #tpu.memory_space<vmem>>, vector<4x4x4xf32>
    tpu.vector_store %arg8[%c0_218, %c0_219, %c12_220], %105 {strides = array<i32>} : memref<4x4x128xf32, #tpu.memory_space<vmem>>, vector<4x4x4xf32>,
    %c0_221 = arith.constant 0 : index
    %c3_222 = arith.constant 3 : index
    %c3_223 = arith.constant 3 : index
    %c0_224 = arith.constant 0 : index
    %107 = tpu.strided_load %arg1[%c0_221, %c3_222, %c3_223, %c0_224] {strides = array<i32: 1, 4, 4, 1>} : memref<1x17x17x4xf32, #tpu.memory_space<vmem>>, vector<1x4x4x4xf32>
    %108 = vector.shape_cast %107 : vector<1x4x4x4xf32> to vector<4x4x4xf32>
    %c0_225 = arith.constant 0 : index
    %c0_226 = arith.constant 0 : index
    %c16_227 = arith.constant 16 : index
    %109 = vector.load %arg8[%c0_225, %c0_226, %c16_227] : memref<4x4x128xf32, #tpu.memory_space<vmem>>, vector<4x4x4xf32>
    tpu.vector_store %arg8[%c0_225, %c0_226, %c16_227], %108 {strides = array<i32>} : memref<4x4x128xf32, #tpu.memory_space<vmem>>, vector<4x4x4xf32>,
    %c0_228 = arith.constant 0 : index
    %c3_229 = arith.constant 3 : index
    %c4_230 = arith.constant 4 : index
    %c0_231 = arith.constant 0 : index
    %110 = tpu.strided_load %arg1[%c0_228, %c3_229, %c4_230, %c0_231] {strides = array<i32: 1, 4, 4, 1>} : memref<1x17x17x4xf32, #tpu.memory_space<vmem>>, vector<1x4x4x4xf32>
    %111 = vector.shape_cast %110 : vector<1x4x4x4xf32> to vector<4x4x4xf32>
    %c0_232 = arith.constant 0 : index
    %c0_233 = arith.constant 0 : index
    %c20_234 = arith.constant 20 : index
    %112 = vector.load %arg8[%c0_232, %c0_233, %c20_234] : memref<4x4x128xf32, #tpu.memory_space<vmem>>, vector<4x4x4xf32>
    tpu.vector_store %arg8[%c0_232, %c0_233, %c20_234], %111 {strides = array<i32>} : memref<4x4x128xf32, #tpu.memory_space<vmem>>, vector<4x4x4xf32>,
    %c0_235 = arith.constant 0 : index
    %c4_236 = arith.constant 4 : index
    %c2_237 = arith.constant 2 : index
    %c0_238 = arith.constant 0 : index
    %113 = tpu.strided_load %arg1[%c0_235, %c4_236, %c2_237, %c0_238] {strides = array<i32: 1, 4, 4, 1>} : memref<1x17x17x4xf32, #tpu.memory_space<vmem>>, vector<1x4x4x4xf32>
    %114 = vector.shape_cast %113 : vector<1x4x4x4xf32> to vector<4x4x4xf32>
    %c0_239 = arith.constant 0 : index
    %c0_240 = arith.constant 0 : index
    %c24_241 = arith.constant 24 : index
    %115 = vector.load %arg8[%c0_239, %c0_240, %c24_241] : memref<4x4x128xf32, #tpu.memory_space<vmem>>, vector<4x4x4xf32>
    tpu.vector_store %arg8[%c0_239, %c0_240, %c24_241], %114 {strides = array<i32>} : memref<4x4x128xf32, #tpu.memory_space<vmem>>, vector<4x4x4xf32>,
    %c0_242 = arith.constant 0 : index
    %c4_243 = arith.constant 4 : index
    %c3_244 = arith.constant 3 : index
    %c0_245 = arith.constant 0 : index
    %116 = tpu.strided_load %arg1[%c0_242, %c4_243, %c3_244, %c0_245] {strides = array<i32: 1, 4, 4, 1>} : memref<1x17x17x4xf32, #tpu.memory_space<vmem>>, vector<1x4x4x4xf32>
    %117 = vector.shape_cast %116 : vector<1x4x4x4xf32> to vector<4x4x4xf32>
    %c0_246 = arith.constant 0 : index
    %c0_247 = arith.constant 0 : index
    %c28_248 = arith.constant 28 : index
    %118 = vector.load %arg8[%c0_246, %c0_247, %c28_248] : memref<4x4x128xf32, #tpu.memory_space<vmem>>, vector<4x4x4xf32>
    tpu.vector_store %arg8[%c0_246, %c0_247, %c28_248], %117 {strides = array<i32>} : memref<4x4x128xf32, #tpu.memory_space<vmem>>, vector<4x4x4xf32>,
    %c0_249 = arith.constant 0 : index
    %c4_250 = arith.constant 4 : index
    %c4_251 = arith.constant 4 : index
    %c0_252 = arith.constant 0 : index
    %119 = tpu.strided_load %arg1[%c0_249, %c4_250, %c4_251, %c0_252] {strides = array<i32: 1, 4, 4, 1>} : memref<1x17x17x4xf32, #tpu.memory_space<vmem>>, vector<1x4x4x4xf32>
    %120 = vector.shape_cast %119 : vector<1x4x4x4xf32> to vector<4x4x4xf32>
    %c0_253 = arith.constant 0 : index
    %c0_254 = arith.constant 0 : index
    %c32_255 = arith.constant 32 : index
    %121 = vector.load %arg8[%c0_253, %c0_254, %c32_255] : memref<4x4x128xf32, #tpu.memory_space<vmem>>, vector<4x4x4xf32>
    tpu.vector_store %arg8[%c0_253, %c0_254, %c32_255], %120 {strides = array<i32>} : memref<4x4x128xf32, #tpu.memory_space<vmem>>, vector<4x4x4xf32>,
    %c0_256 = arith.constant 0 : index
    %c0_257 = arith.constant 0 : index
    %c0_258 = arith.constant 0 : index
    %122 = vector.load %arg8[%c0_256, %c0_257, %c0_258] : memref<4x4x128xf32, #tpu.memory_space<vmem>>, vector<4x4x128xf32>
    %123 = vector.shape_cast %122 : vector<4x4x128xf32> to vector<16x128xf32>
    %cst_259 = arith.constant dense<0.000000e+00> : vector<16x128xf32>
    %124 = tpu.matmul %123, %2, %cst_259 {dimension_numbers = #tpu.dot_dimension_numbers<[1], [0], [0], [1], [0, 0, 1, 1], [], []>} : vector<16x128xf32>, vector<128x128xf32>, vector<16x128xf32> -> vector<16x128xf32>
    %125 = arith.maximumf %94, %124 : vector<16x128xf32>
    %c0_260 = arith.constant 0 : index
    %c0_261 = arith.constant 0 : index
    %126 = vector.load %arg3[%c0_260, %c0_261] : memref<1x128xf32, #tpu.memory_space<vmem>>, vector<1x128xf32>
    %127 = vector.broadcast %126 : vector<1x128xf32> to vector<16x128xf32>
    %128 = arith.addf %125, %127 : vector<16x128xf32>
    %cst_262 = arith.constant 0.000000e+00 : f32
    %129 = vector.broadcast %cst_262 : f32 to vector<1x5x8xf32>
    %c4_263 = arith.constant 4 : index
    %c0_264 = arith.constant 0 : index
    %c0_265 = arith.constant 0 : index
    %130 = vector.load %arg7[%c4_263, %c0_264, %c0_265] : memref<5x5x8xf32, #tpu.memory_space<vmem>>, vector<1x5x8xf32>
    tpu.vector_store %arg7[%c4_263, %c0_264, %c0_265], %129 {strides = array<i32>} : memref<5x5x8xf32, #tpu.memory_space<vmem>>, vector<1x5x8xf32>,
    %cst_266 = arith.constant 0.000000e+00 : f32
    %131 = vector.broadcast %cst_266 : f32 to vector<4x1x8xf32>
    %c0_267 = arith.constant 0 : index
    %c4_268 = arith.constant 4 : index
    %c0_269 = arith.constant 0 : index
    %132 = vector.load %arg7[%c0_267, %c4_268, %c0_269] : memref<5x5x8xf32, #tpu.memory_space<vmem>>, vector<4x1x8xf32>
    tpu.vector_store %arg7[%c0_267, %c4_268, %c0_269], %131 {strides = array<i32>} : memref<5x5x8xf32, #tpu.memory_space<vmem>>, vector<4x1x8xf32>,
    %133 = vector.extract_strided_slice %128 {offsets = [0, 0], sizes = [4, 128], strides = [1, 1]} : vector<16x128xf32> to vector<4x128xf32>
    %134 = vector.extract_strided_slice %128 {offsets = [4, 0], sizes = [4, 128], strides = [1, 1]} : vector<16x128xf32> to vector<4x128xf32>
    %135 = vector.extract_strided_slice %128 {offsets = [8, 0], sizes = [4, 128], strides = [1, 1]} : vector<16x128xf32> to vector<4x128xf32>
    %136 = vector.extract_strided_slice %128 {offsets = [12, 0], sizes = [4, 128], strides = [1, 1]} : vector<16x128xf32> to vector<4x128xf32>
    %137 = vector.shape_cast %133 : vector<4x128xf32> to vector<1x4x128xf32>
    %138 = vector.shape_cast %134 : vector<4x128xf32> to vector<1x4x128xf32>
    %139 = vector.shape_cast %135 : vector<4x128xf32> to vector<1x4x128xf32>
    %140 = vector.shape_cast %136 : vector<4x128xf32> to vector<1x4x128xf32>
    %141 = tpu.concatenate %137, %138, %139, %140 in 0 : vector<1x4x128xf32>, vector<1x4x128xf32>, vector<1x4x128xf32>, vector<1x4x128xf32> -> vector<4x4x128xf32>
    %142 = vector.extract_strided_slice %141 {offsets = [0, 0, 0], sizes = [4, 4, 8], strides = [1, 1, 1]} : vector<4x4x128xf32> to vector<4x4x8xf32>
    %c0_270 = arith.constant 0 : index
    %c0_271 = arith.constant 0 : index
    %c0_272 = arith.constant 0 : index
    %143 = vector.load %arg7[%c0_270, %c0_271, %c0_272] : memref<5x5x8xf32, #tpu.memory_space<vmem>>, vector<4x4x8xf32>
    tpu.vector_store %arg7[%c0_270, %c0_271, %c0_272], %142 {strides = array<i32>} : memref<5x5x8xf32, #tpu.memory_space<vmem>>, vector<4x4x8xf32>,
    %cst_273 = arith.constant 0.000000e+00 : f32
    %144 = vector.broadcast %cst_273 : f32 to vector<1x1x56xf32>
    %c0_274 = arith.constant 0 : index
    %c0_275 = arith.constant 0 : index
    %c72 = arith.constant 72 : index
    %145 = vector.load %arg8[%c0_274, %c0_275, %c72] : memref<4x4x128xf32, #tpu.memory_space<vmem>>, vector<1x1x56xf32>
    tpu.vector_store %arg8[%c0_274, %c0_275, %c72], %144 {strides = array<i32>} : memref<4x4x128xf32, #tpu.memory_space<vmem>>, vector<1x1x56xf32>,
    %c0_276 = arith.constant 0 : index
    %c0_277 = arith.constant 0 : index
    %146 = vector.load %arg4[%c0_276, %c0_277] : memref<128x128xf32, #tpu.memory_space<vmem>>, vector<128x128xf32>
    %c0_278 = arith.constant 0 : index
    %c0_279 = arith.constant 0 : index
    %c0_280 = arith.constant 0 : index
    %147 = tpu.strided_load %arg7[%c0_278, %c0_279, %c0_280] {strides = array<i32: 4, 4, 1>} : memref<5x5x8xf32, #tpu.memory_space<vmem>>, vector<1x1x8xf32>
    %c0_281 = arith.constant 0 : index
    %c0_282 = arith.constant 0 : index
    %c0_283 = arith.constant 0 : index
    %148 = vector.load %arg8[%c0_281, %c0_282, %c0_283] : memref<4x4x128xf32, #tpu.memory_space<vmem>>, vector<1x1x8xf32>
    tpu.vector_store %arg8[%c0_281, %c0_282, %c0_283], %147 {strides = array<i32>} : memref<4x4x128xf32, #tpu.memory_space<vmem>>, vector<1x1x8xf32>,
    %c0_284 = arith.constant 0 : index
    %c1_285 = arith.constant 1 : index
    %c0_286 = arith.constant 0 : index
    %149 = tpu.strided_load %arg7[%c0_284, %c1_285, %c0_286] {strides = array<i32: 4, 4, 1>} : memref<5x5x8xf32, #tpu.memory_space<vmem>>, vector<1x1x8xf32>
    %c0_287 = arith.constant 0 : index
    %c0_288 = arith.constant 0 : index
    %c8_289 = arith.constant 8 : index
    %150 = vector.load %arg8[%c0_287, %c0_288, %c8_289] : memref<4x4x128xf32, #tpu.memory_space<vmem>>, vector<1x1x8xf32>
    tpu.vector_store %arg8[%c0_287, %c0_288, %c8_289], %149 {strides = array<i32>} : memref<4x4x128xf32, #tpu.memory_space<vmem>>, vector<1x1x8xf32>,
    %c0_290 = arith.constant 0 : index
    %c2_291 = arith.constant 2 : index
    %c0_292 = arith.constant 0 : index
    %151 = tpu.strided_load %arg7[%c0_290, %c2_291, %c0_292] {strides = array<i32: 4, 4, 1>} : memref<5x5x8xf32, #tpu.memory_space<vmem>>, vector<1x1x8xf32>
    %c0_293 = arith.constant 0 : index
    %c0_294 = arith.constant 0 : index
    %c16_295 = arith.constant 16 : index
    %152 = vector.load %arg8[%c0_293, %c0_294, %c16_295] : memref<4x4x128xf32, #tpu.memory_space<vmem>>, vector<1x1x8xf32>
    tpu.vector_store %arg8[%c0_293, %c0_294, %c16_295], %151 {strides = array<i32>} : memref<4x4x128xf32, #tpu.memory_space<vmem>>, vector<1x1x8xf32>,
    %c1_296 = arith.constant 1 : index
    %c0_297 = arith.constant 0 : index
    %c0_298 = arith.constant 0 : index
    %153 = tpu.strided_load %arg7[%c1_296, %c0_297, %c0_298] {strides = array<i32: 4, 4, 1>} : memref<5x5x8xf32, #tpu.memory_space<vmem>>, vector<1x1x8xf32>
    %c0_299 = arith.constant 0 : index
    %c0_300 = arith.constant 0 : index
    %c24_301 = arith.constant 24 : index
    %154 = vector.load %arg8[%c0_299, %c0_300, %c24_301] : memref<4x4x128xf32, #tpu.memory_space<vmem>>, vector<1x1x8xf32>
    tpu.vector_store %arg8[%c0_299, %c0_300, %c24_301], %153 {strides = array<i32>} : memref<4x4x128xf32, #tpu.memory_space<vmem>>, vector<1x1x8xf32>,
    %c1_302 = arith.constant 1 : index
    %c1_303 = arith.constant 1 : index
    %c0_304 = arith.constant 0 : index
    %155 = tpu.strided_load %arg7[%c1_302, %c1_303, %c0_304] {strides = array<i32: 4, 4, 1>} : memref<5x5x8xf32, #tpu.memory_space<vmem>>, vector<1x1x8xf32>
    %c0_305 = arith.constant 0 : index
    %c0_306 = arith.constant 0 : index
    %c32_307 = arith.constant 32 : index
    %156 = vector.load %arg8[%c0_305, %c0_306, %c32_307] : memref<4x4x128xf32, #tpu.memory_space<vmem>>, vector<1x1x8xf32>
    tpu.vector_store %arg8[%c0_305, %c0_306, %c32_307], %155 {strides = array<i32>} : memref<4x4x128xf32, #tpu.memory_space<vmem>>, vector<1x1x8xf32>,
    %c1_308 = arith.constant 1 : index
    %c2_309 = arith.constant 2 : index
    %c0_310 = arith.constant 0 : index
    %157 = tpu.strided_load %arg7[%c1_308, %c2_309, %c0_310] {strides = array<i32: 4, 4, 1>} : memref<5x5x8xf32, #tpu.memory_space<vmem>>, vector<1x1x8xf32>
    %c0_311 = arith.constant 0 : index
    %c0_312 = arith.constant 0 : index
    %c40 = arith.constant 40 : index
    %158 = vector.load %arg8[%c0_311, %c0_312, %c40] : memref<4x4x128xf32, #tpu.memory_space<vmem>>, vector<1x1x8xf32>
    tpu.vector_store %arg8[%c0_311, %c0_312, %c40], %157 {strides = array<i32>} : memref<4x4x128xf32, #tpu.memory_space<vmem>>, vector<1x1x8xf32>,
    %c2_313 = arith.constant 2 : index
    %c0_314 = arith.constant 0 : index
    %c0_315 = arith.constant 0 : index
    %159 = tpu.strided_load %arg7[%c2_313, %c0_314, %c0_315] {strides = array<i32: 4, 4, 1>} : memref<5x5x8xf32, #tpu.memory_space<vmem>>, vector<1x1x8xf32>
    %c0_316 = arith.constant 0 : index
    %c0_317 = arith.constant 0 : index
    %c48 = arith.constant 48 : index
    %160 = vector.load %arg8[%c0_316, %c0_317, %c48] : memref<4x4x128xf32, #tpu.memory_space<vmem>>, vector<1x1x8xf32>
    tpu.vector_store %arg8[%c0_316, %c0_317, %c48], %159 {strides = array<i32>} : memref<4x4x128xf32, #tpu.memory_space<vmem>>, vector<1x1x8xf32>,
    %c2_318 = arith.constant 2 : index
    %c1_319 = arith.constant 1 : index
    %c0_320 = arith.constant 0 : index
    %161 = tpu.strided_load %arg7[%c2_318, %c1_319, %c0_320] {strides = array<i32: 4, 4, 1>} : memref<5x5x8xf32, #tpu.memory_space<vmem>>, vector<1x1x8xf32>
    %c0_321 = arith.constant 0 : index
    %c0_322 = arith.constant 0 : index
    %c56 = arith.constant 56 : index
    %162 = vector.load %arg8[%c0_321, %c0_322, %c56] : memref<4x4x128xf32, #tpu.memory_space<vmem>>, vector<1x1x8xf32>
    tpu.vector_store %arg8[%c0_321, %c0_322, %c56], %161 {strides = array<i32>} : memref<4x4x128xf32, #tpu.memory_space<vmem>>, vector<1x1x8xf32>,
    %c2_323 = arith.constant 2 : index
    %c2_324 = arith.constant 2 : index
    %c0_325 = arith.constant 0 : index
    %163 = tpu.strided_load %arg7[%c2_323, %c2_324, %c0_325] {strides = array<i32: 4, 4, 1>} : memref<5x5x8xf32, #tpu.memory_space<vmem>>, vector<1x1x8xf32>
    %c0_326 = arith.constant 0 : index
    %c0_327 = arith.constant 0 : index
    %c64 = arith.constant 64 : index
    %164 = vector.load %arg8[%c0_326, %c0_327, %c64] : memref<4x4x128xf32, #tpu.memory_space<vmem>>, vector<1x1x8xf32>
    tpu.vector_store %arg8[%c0_326, %c0_327, %c64], %163 {strides = array<i32>} : memref<4x4x128xf32, #tpu.memory_space<vmem>>, vector<1x1x8xf32>,
    %c0_328 = arith.constant 0 : index
    %c0_329 = arith.constant 0 : index
    %c0_330 = arith.constant 0 : index
    %165 = vector.load %arg8[%c0_328, %c0_329, %c0_330] : memref<4x4x128xf32, #tpu.memory_space<vmem>>, vector<1x1x128xf32>
    %166 = vector.shape_cast %165 : vector<1x1x128xf32> to vector<1x128xf32>
    %cst_331 = arith.constant dense<0.000000e+00> : vector<1x128xf32>
    %167 = tpu.matmul %166, %146, %cst_331 {dimension_numbers = #tpu.dot_dimension_numbers<[1], [0], [0], [1], [0, 0, 1, 1], [], []>} : vector<1x128xf32>, vector<128x128xf32>, vector<1x128xf32> -> vector<1x128xf32>
    %c0_332 = arith.constant 0 : index
    %c2_333 = arith.constant 2 : index
    %c0_334 = arith.constant 0 : index
    %168 = tpu.strided_load %arg7[%c0_332, %c2_333, %c0_334] {strides = array<i32: 4, 4, 1>} : memref<5x5x8xf32, #tpu.memory_space<vmem>>, vector<1x1x8xf32>
    %c0_335 = arith.constant 0 : index
    %c0_336 = arith.constant 0 : index
    %c0_337 = arith.constant 0 : index
    %169 = vector.load %arg8[%c0_335, %c0_336, %c0_337] : memref<4x4x128xf32, #tpu.memory_space<vmem>>, vector<1x1x8xf32>
    tpu.vector_store %arg8[%c0_335, %c0_336, %c0_337], %168 {strides = array<i32>} : memref<4x4x128xf32, #tpu.memory_space<vmem>>, vector<1x1x8xf32>,
    %c0_338 = arith.constant 0 : index
    %c3_339 = arith.constant 3 : index
    %c0_340 = arith.constant 0 : index
    %170 = tpu.strided_load %arg7[%c0_338, %c3_339, %c0_340] {strides = array<i32: 4, 4, 1>} : memref<5x5x8xf32, #tpu.memory_space<vmem>>, vector<1x1x8xf32>
    %c0_341 = arith.constant 0 : index
    %c0_342 = arith.constant 0 : index
    %c8_343 = arith.constant 8 : index
    %171 = vector.load %arg8[%c0_341, %c0_342, %c8_343] : memref<4x4x128xf32, #tpu.memory_space<vmem>>, vector<1x1x8xf32>
    tpu.vector_store %arg8[%c0_341, %c0_342, %c8_343], %170 {strides = array<i32>} : memref<4x4x128xf32, #tpu.memory_space<vmem>>, vector<1x1x8xf32>,
    %c0_344 = arith.constant 0 : index
    %c4_345 = arith.constant 4 : index
    %c0_346 = arith.constant 0 : index
    %172 = tpu.strided_load %arg7[%c0_344, %c4_345, %c0_346] {strides = array<i32: 4, 4, 1>} : memref<5x5x8xf32, #tpu.memory_space<vmem>>, vector<1x1x8xf32>
    %c0_347 = arith.constant 0 : index
    %c0_348 = arith.constant 0 : index
    %c16_349 = arith.constant 16 : index
    %173 = vector.load %arg8[%c0_347, %c0_348, %c16_349] : memref<4x4x128xf32, #tpu.memory_space<vmem>>, vector<1x1x8xf32>
    tpu.vector_store %arg8[%c0_347, %c0_348, %c16_349], %172 {strides = array<i32>} : memref<4x4x128xf32, #tpu.memory_space<vmem>>, vector<1x1x8xf32>,
    %c1_350 = arith.constant 1 : index
    %c2_351 = arith.constant 2 : index
    %c0_352 = arith.constant 0 : index
    %174 = tpu.strided_load %arg7[%c1_350, %c2_351, %c0_352] {strides = array<i32: 4, 4, 1>} : memref<5x5x8xf32, #tpu.memory_space<vmem>>, vector<1x1x8xf32>
    %c0_353 = arith.constant 0 : index
    %c0_354 = arith.constant 0 : index
    %c24_355 = arith.constant 24 : index
    %175 = vector.load %arg8[%c0_353, %c0_354, %c24_355] : memref<4x4x128xf32, #tpu.memory_space<vmem>>, vector<1x1x8xf32>
    tpu.vector_store %arg8[%c0_353, %c0_354, %c24_355], %174 {strides = array<i32>} : memref<4x4x128xf32, #tpu.memory_space<vmem>>, vector<1x1x8xf32>,
    %c1_356 = arith.constant 1 : index
    %c3_357 = arith.constant 3 : index
    %c0_358 = arith.constant 0 : index
    %176 = tpu.strided_load %arg7[%c1_356, %c3_357, %c0_358] {strides = array<i32: 4, 4, 1>} : memref<5x5x8xf32, #tpu.memory_space<vmem>>, vector<1x1x8xf32>
    %c0_359 = arith.constant 0 : index
    %c0_360 = arith.constant 0 : index
    %c32_361 = arith.constant 32 : index
    %177 = vector.load %arg8[%c0_359, %c0_360, %c32_361] : memref<4x4x128xf32, #tpu.memory_space<vmem>>, vector<1x1x8xf32>
    tpu.vector_store %arg8[%c0_359, %c0_360, %c32_361], %176 {strides = array<i32>} : memref<4x4x128xf32, #tpu.memory_space<vmem>>, vector<1x1x8xf32>,
    %c1_362 = arith.constant 1 : index
    %c4_363 = arith.constant 4 : index
    %c0_364 = arith.constant 0 : index
    %178 = tpu.strided_load %arg7[%c1_362, %c4_363, %c0_364] {strides = array<i32: 4, 4, 1>} : memref<5x5x8xf32, #tpu.memory_space<vmem>>, vector<1x1x8xf32>
    %c0_365 = arith.constant 0 : index
    %c0_366 = arith.constant 0 : index
    %c40_367 = arith.constant 40 : index
    %179 = vector.load %arg8[%c0_365, %c0_366, %c40_367] : memref<4x4x128xf32, #tpu.memory_space<vmem>>, vector<1x1x8xf32>
    tpu.vector_store %arg8[%c0_365, %c0_366, %c40_367], %178 {strides = array<i32>} : memref<4x4x128xf32, #tpu.memory_space<vmem>>, vector<1x1x8xf32>,
    %c2_368 = arith.constant 2 : index
    %c2_369 = arith.constant 2 : index
    %c0_370 = arith.constant 0 : index
    %180 = tpu.strided_load %arg7[%c2_368, %c2_369, %c0_370] {strides = array<i32: 4, 4, 1>} : memref<5x5x8xf32, #tpu.memory_space<vmem>>, vector<1x1x8xf32>
    %c0_371 = arith.constant 0 : index
    %c0_372 = arith.constant 0 : index
    %c48_373 = arith.constant 48 : index
    %181 = vector.load %arg8[%c0_371, %c0_372, %c48_373] : memref<4x4x128xf32, #tpu.memory_space<vmem>>, vector<1x1x8xf32>
    tpu.vector_store %arg8[%c0_371, %c0_372, %c48_373], %180 {strides = array<i32>} : memref<4x4x128xf32, #tpu.memory_space<vmem>>, vector<1x1x8xf32>,
    %c2_374 = arith.constant 2 : index
    %c3_375 = arith.constant 3 : index
    %c0_376 = arith.constant 0 : index
    %182 = tpu.strided_load %arg7[%c2_374, %c3_375, %c0_376] {strides = array<i32: 4, 4, 1>} : memref<5x5x8xf32, #tpu.memory_space<vmem>>, vector<1x1x8xf32>
    %c0_377 = arith.constant 0 : index
    %c0_378 = arith.constant 0 : index
    %c56_379 = arith.constant 56 : index
    %183 = vector.load %arg8[%c0_377, %c0_378, %c56_379] : memref<4x4x128xf32, #tpu.memory_space<vmem>>, vector<1x1x8xf32>
    tpu.vector_store %arg8[%c0_377, %c0_378, %c56_379], %182 {strides = array<i32>} : memref<4x4x128xf32, #tpu.memory_space<vmem>>, vector<1x1x8xf32>,
    %c2_380 = arith.constant 2 : index
    %c4_381 = arith.constant 4 : index
    %c0_382 = arith.constant 0 : index
    %184 = tpu.strided_load %arg7[%c2_380, %c4_381, %c0_382] {strides = array<i32: 4, 4, 1>} : memref<5x5x8xf32, #tpu.memory_space<vmem>>, vector<1x1x8xf32>
    %c0_383 = arith.constant 0 : index
    %c0_384 = arith.constant 0 : index
    %c64_385 = arith.constant 64 : index
    %185 = vector.load %arg8[%c0_383, %c0_384, %c64_385] : memref<4x4x128xf32, #tpu.memory_space<vmem>>, vector<1x1x8xf32>
    tpu.vector_store %arg8[%c0_383, %c0_384, %c64_385], %184 {strides = array<i32>} : memref<4x4x128xf32, #tpu.memory_space<vmem>>, vector<1x1x8xf32>,
    %c0_386 = arith.constant 0 : index
    %c0_387 = arith.constant 0 : index
    %c0_388 = arith.constant 0 : index
    %186 = vector.load %arg8[%c0_386, %c0_387, %c0_388] : memref<4x4x128xf32, #tpu.memory_space<vmem>>, vector<1x1x128xf32>
    %187 = vector.shape_cast %186 : vector<1x1x128xf32> to vector<1x128xf32>
    %cst_389 = arith.constant dense<0.000000e+00> : vector<1x128xf32>
    %188 = tpu.matmul %187, %146, %cst_389 {dimension_numbers = #tpu.dot_dimension_numbers<[1], [0], [0], [1], [0, 0, 1, 1], [], []>} : vector<1x128xf32>, vector<128x128xf32>, vector<1x128xf32> -> vector<1x128xf32>
    %189 = arith.maximumf %167, %188 : vector<1x128xf32>
    %c2_390 = arith.constant 2 : index
    %c0_391 = arith.constant 0 : index
    %c0_392 = arith.constant 0 : index
    %190 = tpu.strided_load %arg7[%c2_390, %c0_391, %c0_392] {strides = array<i32: 4, 4, 1>} : memref<5x5x8xf32, #tpu.memory_space<vmem>>, vector<1x1x8xf32>
    %c0_393 = arith.constant 0 : index
    %c0_394 = arith.constant 0 : index
    %c0_395 = arith.constant 0 : index
    %191 = vector.load %arg8[%c0_393, %c0_394, %c0_395] : memref<4x4x128xf32, #tpu.memory_space<vmem>>, vector<1x1x8xf32>
    tpu.vector_store %arg8[%c0_393, %c0_394, %c0_395], %190 {strides = array<i32>} : memref<4x4x128xf32, #tpu.memory_space<vmem>>, vector<1x1x8xf32>,
    %c2_396 = arith.constant 2 : index
    %c1_397 = arith.constant 1 : index
    %c0_398 = arith.constant 0 : index
    %192 = tpu.strided_load %arg7[%c2_396, %c1_397, %c0_398] {strides = array<i32: 4, 4, 1>} : memref<5x5x8xf32, #tpu.memory_space<vmem>>, vector<1x1x8xf32>
    %c0_399 = arith.constant 0 : index
    %c0_400 = arith.constant 0 : index
    %c8_401 = arith.constant 8 : index
    %193 = vector.load %arg8[%c0_399, %c0_400, %c8_401] : memref<4x4x128xf32, #tpu.memory_space<vmem>>, vector<1x1x8xf32>
    tpu.vector_store %arg8[%c0_399, %c0_400, %c8_401], %192 {strides = array<i32>} : memref<4x4x128xf32, #tpu.memory_space<vmem>>, vector<1x1x8xf32>,
    %c2_402 = arith.constant 2 : index
    %c2_403 = arith.constant 2 : index
    %c0_404 = arith.constant 0 : index
    %194 = tpu.strided_load %arg7[%c2_402, %c2_403, %c0_404] {strides = array<i32: 4, 4, 1>} : memref<5x5x8xf32, #tpu.memory_space<vmem>>, vector<1x1x8xf32>
    %c0_405 = arith.constant 0 : index
    %c0_406 = arith.constant 0 : index
    %c16_407 = arith.constant 16 : index
    %195 = vector.load %arg8[%c0_405, %c0_406, %c16_407] : memref<4x4x128xf32, #tpu.memory_space<vmem>>, vector<1x1x8xf32>
    tpu.vector_store %arg8[%c0_405, %c0_406, %c16_407], %194 {strides = array<i32>} : memref<4x4x128xf32, #tpu.memory_space<vmem>>, vector<1x1x8xf32>,
    %c3_408 = arith.constant 3 : index
    %c0_409 = arith.constant 0 : index
    %c0_410 = arith.constant 0 : index
    %196 = tpu.strided_load %arg7[%c3_408, %c0_409, %c0_410] {strides = array<i32: 4, 4, 1>} : memref<5x5x8xf32, #tpu.memory_space<vmem>>, vector<1x1x8xf32>
    %c0_411 = arith.constant 0 : index
    %c0_412 = arith.constant 0 : index
    %c24_413 = arith.constant 24 : index
    %197 = vector.load %arg8[%c0_411, %c0_412, %c24_413] : memref<4x4x128xf32, #tpu.memory_space<vmem>>, vector<1x1x8xf32>
    tpu.vector_store %arg8[%c0_411, %c0_412, %c24_413], %196 {strides = array<i32>} : memref<4x4x128xf32, #tpu.memory_space<vmem>>, vector<1x1x8xf32>,
    %c3_414 = arith.constant 3 : index
    %c1_415 = arith.constant 1 : index
    %c0_416 = arith.constant 0 : index
    %198 = tpu.strided_load %arg7[%c3_414, %c1_415, %c0_416] {strides = array<i32: 4, 4, 1>} : memref<5x5x8xf32, #tpu.memory_space<vmem>>, vector<1x1x8xf32>
    %c0_417 = arith.constant 0 : index
    %c0_418 = arith.constant 0 : index
    %c32_419 = arith.constant 32 : index
    %199 = vector.load %arg8[%c0_417, %c0_418, %c32_419] : memref<4x4x128xf32, #tpu.memory_space<vmem>>, vector<1x1x8xf32>
    tpu.vector_store %arg8[%c0_417, %c0_418, %c32_419], %198 {strides = array<i32>} : memref<4x4x128xf32, #tpu.memory_space<vmem>>, vector<1x1x8xf32>,
    %c3_420 = arith.constant 3 : index
    %c2_421 = arith.constant 2 : index
    %c0_422 = arith.constant 0 : index
    %200 = tpu.strided_load %arg7[%c3_420, %c2_421, %c0_422] {strides = array<i32: 4, 4, 1>} : memref<5x5x8xf32, #tpu.memory_space<vmem>>, vector<1x1x8xf32>
    %c0_423 = arith.constant 0 : index
    %c0_424 = arith.constant 0 : index
    %c40_425 = arith.constant 40 : index
    %201 = vector.load %arg8[%c0_423, %c0_424, %c40_425] : memref<4x4x128xf32, #tpu.memory_space<vmem>>, vector<1x1x8xf32>
    tpu.vector_store %arg8[%c0_423, %c0_424, %c40_425], %200 {strides = array<i32>} : memref<4x4x128xf32, #tpu.memory_space<vmem>>, vector<1x1x8xf32>,
    %c4_426 = arith.constant 4 : index
    %c0_427 = arith.constant 0 : index
    %c0_428 = arith.constant 0 : index
    %202 = tpu.strided_load %arg7[%c4_426, %c0_427, %c0_428] {strides = array<i32: 4, 4, 1>} : memref<5x5x8xf32, #tpu.memory_space<vmem>>, vector<1x1x8xf32>
    %c0_429 = arith.constant 0 : index
    %c0_430 = arith.constant 0 : index
    %c48_431 = arith.constant 48 : index
    %203 = vector.load %arg8[%c0_429, %c0_430, %c48_431] : memref<4x4x128xf32, #tpu.memory_space<vmem>>, vector<1x1x8xf32>
    tpu.vector_store %arg8[%c0_429, %c0_430, %c48_431], %202 {strides = array<i32>} : memref<4x4x128xf32, #tpu.memory_space<vmem>>, vector<1x1x8xf32>,
    %c4_432 = arith.constant 4 : index
    %c1_433 = arith.constant 1 : index
    %c0_434 = arith.constant 0 : index
    %204 = tpu.strided_load %arg7[%c4_432, %c1_433, %c0_434] {strides = array<i32: 4, 4, 1>} : memref<5x5x8xf32, #tpu.memory_space<vmem>>, vector<1x1x8xf32>
    %c0_435 = arith.constant 0 : index
    %c0_436 = arith.constant 0 : index
    %c56_437 = arith.constant 56 : index
    %205 = vector.load %arg8[%c0_435, %c0_436, %c56_437] : memref<4x4x128xf32, #tpu.memory_space<vmem>>, vector<1x1x8xf32>
    tpu.vector_store %arg8[%c0_435, %c0_436, %c56_437], %204 {strides = array<i32>} : memref<4x4x128xf32, #tpu.memory_space<vmem>>, vector<1x1x8xf32>,
    %c4_438 = arith.constant 4 : index
    %c2_439 = arith.constant 2 : index
    %c0_440 = arith.constant 0 : index
    %206 = tpu.strided_load %arg7[%c4_438, %c2_439, %c0_440] {strides = array<i32: 4, 4, 1>} : memref<5x5x8xf32, #tpu.memory_space<vmem>>, vector<1x1x8xf32>
    %c0_441 = arith.constant 0 : index
    %c0_442 = arith.constant 0 : index
    %c64_443 = arith.constant 64 : index
    %207 = vector.load %arg8[%c0_441, %c0_442, %c64_443] : memref<4x4x128xf32, #tpu.memory_space<vmem>>, vector<1x1x8xf32>
    tpu.vector_store %arg8[%c0_441, %c0_442, %c64_443], %206 {strides = array<i32>} : memref<4x4x128xf32, #tpu.memory_space<vmem>>, vector<1x1x8xf32>,
    %c0_444 = arith.constant 0 : index
    %c0_445 = arith.constant 0 : index
    %c0_446 = arith.constant 0 : index
    %208 = vector.load %arg8[%c0_444, %c0_445, %c0_446] : memref<4x4x128xf32, #tpu.memory_space<vmem>>, vector<1x1x128xf32>
    %209 = vector.shape_cast %208 : vector<1x1x128xf32> to vector<1x128xf32>
    %cst_447 = arith.constant dense<0.000000e+00> : vector<1x128xf32>
    %210 = tpu.matmul %209, %146, %cst_447 {dimension_numbers = #tpu.dot_dimension_numbers<[1], [0], [0], [1], [0, 0, 1, 1], [], []>} : vector<1x128xf32>, vector<128x128xf32>, vector<1x128xf32> -> vector<1x128xf32>
    %211 = arith.maximumf %189, %210 : vector<1x128xf32>
    %c2_448 = arith.constant 2 : index
    %c2_449 = arith.constant 2 : index
    %c0_450 = arith.constant 0 : index
    %212 = tpu.strided_load %arg7[%c2_448, %c2_449, %c0_450] {strides = array<i32: 4, 4, 1>} : memref<5x5x8xf32, #tpu.memory_space<vmem>>, vector<1x1x8xf32>
    %c0_451 = arith.constant 0 : index
    %c0_452 = arith.constant 0 : index
    %c0_453 = arith.constant 0 : index
    %213 = vector.load %arg8[%c0_451, %c0_452, %c0_453] : memref<4x4x128xf32, #tpu.memory_space<vmem>>, vector<1x1x8xf32>
    tpu.vector_store %arg8[%c0_451, %c0_452, %c0_453], %212 {strides = array<i32>} : memref<4x4x128xf32, #tpu.memory_space<vmem>>, vector<1x1x8xf32>,
    %c2_454 = arith.constant 2 : index
    %c3_455 = arith.constant 3 : index
    %c0_456 = arith.constant 0 : index
    %214 = tpu.strided_load %arg7[%c2_454, %c3_455, %c0_456] {strides = array<i32: 4, 4, 1>} : memref<5x5x8xf32, #tpu.memory_space<vmem>>, vector<1x1x8xf32>
    %c0_457 = arith.constant 0 : index
    %c0_458 = arith.constant 0 : index
    %c8_459 = arith.constant 8 : index
    %215 = vector.load %arg8[%c0_457, %c0_458, %c8_459] : memref<4x4x128xf32, #tpu.memory_space<vmem>>, vector<1x1x8xf32>
    tpu.vector_store %arg8[%c0_457, %c0_458, %c8_459], %214 {strides = array<i32>} : memref<4x4x128xf32, #tpu.memory_space<vmem>>, vector<1x1x8xf32>,
    %c2_460 = arith.constant 2 : index
    %c4_461 = arith.constant 4 : index
    %c0_462 = arith.constant 0 : index
    %216 = tpu.strided_load %arg7[%c2_460, %c4_461, %c0_462] {strides = array<i32: 4, 4, 1>} : memref<5x5x8xf32, #tpu.memory_space<vmem>>, vector<1x1x8xf32>
    %c0_463 = arith.constant 0 : index
    %c0_464 = arith.constant 0 : index
    %c16_465 = arith.constant 16 : index
    %217 = vector.load %arg8[%c0_463, %c0_464, %c16_465] : memref<4x4x128xf32, #tpu.memory_space<vmem>>, vector<1x1x8xf32>
    tpu.vector_store %arg8[%c0_463, %c0_464, %c16_465], %216 {strides = array<i32>} : memref<4x4x128xf32, #tpu.memory_space<vmem>>, vector<1x1x8xf32>,
    %c3_466 = arith.constant 3 : index
    %c2_467 = arith.constant 2 : index
    %c0_468 = arith.constant 0 : index
    %218 = tpu.strided_load %arg7[%c3_466, %c2_467, %c0_468] {strides = array<i32: 4, 4, 1>} : memref<5x5x8xf32, #tpu.memory_space<vmem>>, vector<1x1x8xf32>
    %c0_469 = arith.constant 0 : index
    %c0_470 = arith.constant 0 : index
    %c24_471 = arith.constant 24 : index
    %219 = vector.load %arg8[%c0_469, %c0_470, %c24_471] : memref<4x4x128xf32, #tpu.memory_space<vmem>>, vector<1x1x8xf32>
    tpu.vector_store %arg8[%c0_469, %c0_470, %c24_471], %218 {strides = array<i32>} : memref<4x4x128xf32, #tpu.memory_space<vmem>>, vector<1x1x8xf32>,
    %c3_472 = arith.constant 3 : index
    %c3_473 = arith.constant 3 : index
    %c0_474 = arith.constant 0 : index
    %220 = tpu.strided_load %arg7[%c3_472, %c3_473, %c0_474] {strides = array<i32: 4, 4, 1>} : memref<5x5x8xf32, #tpu.memory_space<vmem>>, vector<1x1x8xf32>
    %c0_475 = arith.constant 0 : index
    %c0_476 = arith.constant 0 : index
    %c32_477 = arith.constant 32 : index
    %221 = vector.load %arg8[%c0_475, %c0_476, %c32_477] : memref<4x4x128xf32, #tpu.memory_space<vmem>>, vector<1x1x8xf32>
    tpu.vector_store %arg8[%c0_475, %c0_476, %c32_477], %220 {strides = array<i32>} : memref<4x4x128xf32, #tpu.memory_space<vmem>>, vector<1x1x8xf32>,
    %c3_478 = arith.constant 3 : index
    %c4_479 = arith.constant 4 : index
    %c0_480 = arith.constant 0 : index
    %222 = tpu.strided_load %arg7[%c3_478, %c4_479, %c0_480] {strides = array<i32: 4, 4, 1>} : memref<5x5x8xf32, #tpu.memory_space<vmem>>, vector<1x1x8xf32>
    %c0_481 = arith.constant 0 : index
    %c0_482 = arith.constant 0 : index
    %c40_483 = arith.constant 40 : index
    %223 = vector.load %arg8[%c0_481, %c0_482, %c40_483] : memref<4x4x128xf32, #tpu.memory_space<vmem>>, vector<1x1x8xf32>
    tpu.vector_store %arg8[%c0_481, %c0_482, %c40_483], %222 {strides = array<i32>} : memref<4x4x128xf32, #tpu.memory_space<vmem>>, vector<1x1x8xf32>,
    %c4_484 = arith.constant 4 : index
    %c2_485 = arith.constant 2 : index
    %c0_486 = arith.constant 0 : index
    %224 = tpu.strided_load %arg7[%c4_484, %c2_485, %c0_486] {strides = array<i32: 4, 4, 1>} : memref<5x5x8xf32, #tpu.memory_space<vmem>>, vector<1x1x8xf32>
    %c0_487 = arith.constant 0 : index
    %c0_488 = arith.constant 0 : index
    %c48_489 = arith.constant 48 : index
    %225 = vector.load %arg8[%c0_487, %c0_488, %c48_489] : memref<4x4x128xf32, #tpu.memory_space<vmem>>, vector<1x1x8xf32>
    tpu.vector_store %arg8[%c0_487, %c0_488, %c48_489], %224 {strides = array<i32>} : memref<4x4x128xf32, #tpu.memory_space<vmem>>, vector<1x1x8xf32>,
    %c4_490 = arith.constant 4 : index
    %c3_491 = arith.constant 3 : index
    %c0_492 = arith.constant 0 : index
    %226 = tpu.strided_load %arg7[%c4_490, %c3_491, %c0_492] {strides = array<i32: 4, 4, 1>} : memref<5x5x8xf32, #tpu.memory_space<vmem>>, vector<1x1x8xf32>
    %c0_493 = arith.constant 0 : index
    %c0_494 = arith.constant 0 : index
    %c56_495 = arith.constant 56 : index
    %227 = vector.load %arg8[%c0_493, %c0_494, %c56_495] : memref<4x4x128xf32, #tpu.memory_space<vmem>>, vector<1x1x8xf32>
    tpu.vector_store %arg8[%c0_493, %c0_494, %c56_495], %226 {strides = array<i32>} : memref<4x4x128xf32, #tpu.memory_space<vmem>>, vector<1x1x8xf32>,
    %c4_496 = arith.constant 4 : index
    %c4_497 = arith.constant 4 : index
    %c0_498 = arith.constant 0 : index
    %228 = tpu.strided_load %arg7[%c4_496, %c4_497, %c0_498] {strides = array<i32: 4, 4, 1>} : memref<5x5x8xf32, #tpu.memory_space<vmem>>, vector<1x1x8xf32>
    %c0_499 = arith.constant 0 : index
    %c0_500 = arith.constant 0 : index
    %c64_501 = arith.constant 64 : index
    %229 = vector.load %arg8[%c0_499, %c0_500, %c64_501] : memref<4x4x128xf32, #tpu.memory_space<vmem>>, vector<1x1x8xf32>
    tpu.vector_store %arg8[%c0_499, %c0_500, %c64_501], %228 {strides = array<i32>} : memref<4x4x128xf32, #tpu.memory_space<vmem>>, vector<1x1x8xf32>,
    %c0_502 = arith.constant 0 : index
    %c0_503 = arith.constant 0 : index
    %c0_504 = arith.constant 0 : index
    %230 = vector.load %arg8[%c0_502, %c0_503, %c0_504] : memref<4x4x128xf32, #tpu.memory_space<vmem>>, vector<1x1x128xf32>
    %231 = vector.shape_cast %230 : vector<1x1x128xf32> to vector<1x128xf32>
    %cst_505 = arith.constant dense<0.000000e+00> : vector<1x128xf32>
    %232 = tpu.matmul %231, %146, %cst_505 {dimension_numbers = #tpu.dot_dimension_numbers<[1], [0], [0], [1], [0, 0, 1, 1], [], []>} : vector<1x128xf32>, vector<128x128xf32>, vector<1x128xf32> -> vector<1x128xf32>
    %233 = arith.maximumf %211, %232 : vector<1x128xf32>
    %c0_506 = arith.constant 0 : index
    %c0_507 = arith.constant 0 : index
    %234 = vector.load %arg5[%c0_506, %c0_507] : memref<1x128xf32, #tpu.memory_space<vmem>>, vector<1x128xf32>
    %235 = arith.addf %233, %234 : vector<1x128xf32>
    %236 = vector.extract_strided_slice %235 {offsets = [0, 0], sizes = [1, 16], strides = [1, 1]} : vector<1x128xf32> to vector<1x16xf32>
    %c0_508 = arith.constant 0 : index
    %c0_509 = arith.constant 0 : index
    %c0_510 = arith.constant 0 : index
    %237 = vector.load %arg6[%c0_508, %c0_509, %c0_510] : memref<1x1x16xf32, #tpu.memory_space<vmem>>, vector<1x1x16xf32>
    %238 = vector.shape_cast %237 : vector<1x1x16xf32> to vector<1x16xf32>
    %239 = vector.shape_cast %236 : vector<1x16xf32> to vector<1x1x16xf32>
    tpu.vector_store %arg6[%c0_508, %c0_509, %c0_510], %239 {strides = array<i32>} : memref<1x1x16xf32, #tpu.memory_space<vmem>>, vector<1x1x16xf32>,
    return
  }
  func.func @transform_0(%arg0: i32) -> (i32, i32, i32, i32) {
    %c0_i32 = arith.constant 0 : i32
    %c0_i32_0 = arith.constant 0 : i32
    %c0_i32_1 = arith.constant 0 : i32
    %c0_i32_2 = arith.constant 0 : i32
    return %arg0, %c0_i32, %c0_i32_0, %c0_i32_1 : i32, i32, i32, i32
  }
  func.func @transform_1(%arg0: i32) -> (i32, i32) {
    %c0_i32 = arith.constant 0 : i32
    %c0_i32_0 = arith.constant 0 : i32
    %c0_i32_1 = arith.constant 0 : i32
    return %c0_i32, %c0_i32_0 : i32, i32
  }
  func.func @transform_2(%arg0: i32) -> (i32, i32) {
    %c0_i32 = arith.constant 0 : i32
    %c0_i32_0 = arith.constant 0 : i32
    %c0_i32_1 = arith.constant 0 : i32
    return %c0_i32, %c0_i32_0 : i32, i32
  }
  func.func @transform_3(%arg0: i32) -> (i32, i32) {
    %c0_i32 = arith.constant 0 : i32
    %c0_i32_0 = arith.constant 0 : i32
    %c0_i32_1 = arith.constant 0 : i32
    return %c0_i32, %c0_i32_0 : i32, i32
  }
  func.func @transform_4(%arg0: i32) -> (i32, i32) {
    %c0_i32 = arith.constant 0 : i32
    %c0_i32_0 = arith.constant 0 : i32
    %c0_i32_1 = arith.constant 0 : i32
    return %c0_i32, %c0_i32_0 : i32, i32
  }
  func.func @transform_5(%arg0: i32) -> (i32, i32, i32) {
    %c0_i32 = arith.constant 0 : i32
    %c0_i32_0 = arith.constant 0 : i32
    %c0_i32_1 = arith.constant 0 : i32
    return %arg0, %c0_i32, %c0_i32_0 : i32, i32, i32
  }
}

</mosaic_0001>

<llo_original>
// kernel: tpu_custom_call.1
$region0: #{tpu_custom_call.1}
  #allocation0 [shape = 'u32[]', space=smem, size = 0x4, offset = 0x4, fixed_abs, tag = 'smem constant byte address 0x4 - core index']
  #allocation1 [shape = 'u32[72,128]{1,0:T(1,128)}', space=vmem, size = 0x9000, scoped, tag = 'internal scratch']
  #allocation2 [shape = 'f32[5,5,8]{2,1,0:T(8,128)}', space=vmem, size = 0x5000, scoped, tag = 'scratch operand']
  #allocation3 [shape = 'f32[4,4,128]{2,1,0:T(4,128)}', space=vmem, size = 0x2000, scoped, tag = 'scratch operand']
  %s0 = inlined_call_operand.vmem [shape: f32[2,17,17,4], index: 0, kind: input, shape index: {}]
  %s1 = inlined_call_operand.vmem [shape: f32[128,128], index: 1, kind: input, shape index: {}]
  %s2 = inlined_call_operand.vmem [shape: f32[1,128], index: 2, kind: input, shape index: {}]
  %s3 = inlined_call_operand.vmem [shape: f32[128,128], index: 3, kind: input, shape index: {}]
  %s4 = inlined_call_operand.vmem [shape: f32[1,128], index: 4, kind: input, shape index: {}]
  %s5 = inlined_call_operand.hbm [shape: f32[2,1,16], index: 5, kind: output, shape index: {}]
  %s6 = sld [smem:[#allocation0]]
  $region53: #{tpu_custom_call.1} parent=0
    _
  %s8 = ssub.s32 1, %s6
  %s9 = scalar_select 0, %s8, %s6
  $region1: #{tpu_custom_call.1} parent=0
    #allocation4 [shape = 'u8[1024]{0}', space=vmem, size = 0x400, scoped, tag = 'output window, operand 0']
    #allocation5 [shape = 's32[2]{0}', space=sflag, size = 0x8, scoped, tag = 'scoped memory for tpu_custom_call.1']
    %10 = vsyncpa [#allocation5], 0
    %s11 = scalar_lea.sflag [#allocation5], 1
    %12 = vsyncpa %s11, 0
    loop: start=0, step=1, limit=4
    $region2: #{tpu_custom_call.1} parent=1 // loop_pre_header
      _
    $region3: #{tpu_custom_call.1} parent=1 // loop_header
      %s14 = sphi 0, %s18
      %p15 = scmp.ge.s32.totalorder %s14, 4
      %s24 = sphi 0, %s26
      %s27 = sphi 0, %s24
      %s28 = sphi 0, %s27
      %s44 = sphi 0, %s28
      %s48 = sphi 0, %s48
      %s50 = sphi 0, %s48
      %s51 = sphi 0, %s50
      %s65 = sphi 0, %s51
      %s69 = sphi 0, %s69
      %s71 = sphi 0, %s69
      %s72 = sphi 0, %s71
      %s86 = sphi 0, %s72
      %s90 = sphi 0, %s90
      %s92 = sphi 0, %s90
      %s93 = sphi 0, %s92
      %s107 = sphi 0, %s93
      %s111 = sphi 0, %s111
      %s113 = sphi 0, %s111
      %s114 = sphi 0, %s113
      %s128 = sphi 0, %s114
      %s134 = sphi 0, %s136
      %s137 = sphi 0, %s134
      %s138 = sphi 0, %s137
      %s154 = sphi 0, %s138
    $region4: #{tpu_custom_call.1} parent=1 // loop_header_branch
      %17 = sbr.rel (%p15) target = $region8
    $region5: #{tpu_custom_call.1} parent=1 // loop_body
      %s19 = ssub.s32 %s14, 1
      %s20 = ssub.s32 %s14, 2
      %s21 = sadd.s32 %s14, 1
      %s22 = ssub.s32 %s14, %s21
      %p23 = scmp.eq.s32.totalorder %s22, 0
      %s25 = sadd.s32 %s24, 1
      %s26 = scalar_select %p23, %s24, %s25
      %p29 = pneg %p23
      %p30 = scmp.eq.s32.totalorder %s14, 1
      %p31 = por %p29, %p30
      %p32 = scmp.ne.s32.totalorder %s24, %s27
      %p33 = scmp.eq.s32.totalorder %s14, 0
      %p34 = por %p32, %p33
      %p35 = scmp.ne.s32.totalorder %s24, %s27
      %p36 = scmp.eq.s32.totalorder %s19, 1
      %p37 = por %p35, %p36
      %p38 = scmp.ne.s32.totalorder %s27, %s28
      %p39 = scmp.eq.s32.totalorder %s19, 0
      %p40 = por %p38, %p39
      %p41 = scmp.ne.s32.totalorder %s27, %s28
      %p42 = scmp.eq.s32.totalorder %s20, 1
      %p43 = por %p41, %p42
      %p45 = scmp.ne.s32.totalorder %s28, %s44
      %p46 = scmp.eq.s32.totalorder %s20, 0
      %p47 = por %p45, %p46
      %s49 = sadd.s32 %s48, 1
      %p52 = scmp.eq.s32.totalorder %s14, 1
      %p53 = scmp.ne.s32.totalorder %s48, %s50
      %p54 = scmp.eq.s32.totalorder %s14, 0
      %p55 = por %p53, %p54
      %p56 = scmp.ne.s32.totalorder %s48, %s50
      %p57 = scmp.eq.s32.totalorder %s19, 1
      %p58 = por %p56, %p57
      %p59 = scmp.ne.s32.totalorder %s50, %s51
      %p60 = scmp.eq.s32.totalorder %s19, 0
      %p61 = por %p59, %p60
      %p62 = scmp.ne.s32.totalorder %s50, %s51
      %p63 = scmp.eq.s32.totalorder %s20, 1
      %p64 = por %p62, %p63
      %p66 = scmp.ne.s32.totalorder %s51, %s65
      %p67 = scmp.eq.s32.totalorder %s20, 0
      %p68 = por %p66, %p67
      %s70 = sadd.s32 %s69, 1
      %p73 = scmp.eq.s32.totalorder %s14, 1
      %p74 = scmp.ne.s32.totalorder %s69, %s71
      %p75 = scmp.eq.s32.totalorder %s14, 0
      %p76 = por %p74, %p75
      %p77 = scmp.ne.s32.totalorder %s69, %s71
      %p78 = scmp.eq.s32.totalorder %s19, 1
      %p79 = por %p77, %p78
      %p80 = scmp.ne.s32.totalorder %s71, %s72
      %p81 = scmp.eq.s32.totalorder %s19, 0
      %p82 = por %p80, %p81
      %p83 = scmp.ne.s32.totalorder %s71, %s72
      %p84 = scmp.eq.s32.totalorder %s20, 1
      %p85 = por %p83, %p84
      %p87 = scmp.ne.s32.totalorder %s72, %s86
      %p88 = scmp.eq.s32.totalorder %s20, 0
      %p89 = por %p87, %p88
      %s91 = sadd.s32 %s90, 1
      %p94 = scmp.eq.s32.totalorder %s14, 1
      %p95 = scmp.ne.s32.totalorder %s90, %s92
      %p96 = scmp.eq.s32.totalorder %s14, 0
      %p97 = por %p95, %p96
      %p98 = scmp.ne.s32.totalorder %s90, %s92
      %p99 = scmp.eq.s32.totalorder %s19, 1
      %p100 = por %p98, %p99
      %p101 = scmp.ne.s32.totalorder %s92, %s93
      %p102 = scmp.eq.s32.totalorder %s19, 0
      %p103 = por %p101, %p102
      %p104 = scmp.ne.s32.totalorder %s92, %s93
      %p105 = scmp.eq.s32.totalorder %s20, 1
      %p106 = por %p104, %p105
      %p108 = scmp.ne.s32.totalorder %s93, %s107
      %p109 = scmp.eq.s32.totalorder %s20, 0
      %p110 = por %p108, %p109
      %s112 = sadd.s32 %s111, 1
      %p115 = scmp.eq.s32.totalorder %s14, 1
      %p116 = scmp.ne.s32.totalorder %s111, %s113
      %p117 = scmp.eq.s32.totalorder %s14, 0
      %p118 = por %p116, %p117
      %p119 = scmp.ne.s32.totalorder %s111, %s113
      %p120 = scmp.eq.s32.totalorder %s19, 1
      %p121 = por %p119, %p120
      %p122 = scmp.ne.s32.totalorder %s113, %s114
      %p123 = scmp.eq.s32.totalorder %s19, 0
      %p124 = por %p122, %p123
      %p125 = scmp.ne.s32.totalorder %s113, %s114
      %p126 = scmp.eq.s32.totalorder %s20, 1
      %p127 = por %p125, %p126
      %p129 = scmp.ne.s32.totalorder %s114, %s128
      %p130 = scmp.eq.s32.totalorder %s20, 0
      %p131 = por %p129, %p130
      %s132 = ssub.s32 %s14, %s21
      %p133 = scmp.eq.s32.totalorder %s132, 0
      %s135 = sadd.s32 %s134, 1
      %s136 = scalar_select %p133, %s134, %s135
      %p139 = pneg %p133
      %p140 = scmp.eq.s32.totalorder %s14, 1
      %p141 = por %p139, %p140
      %p142 = scmp.ne.s32.totalorder %s134, %s137
      %p143 = scmp.eq.s32.totalorder %s14, 0
      %p144 = por %p142, %p143
      %p145 = scmp.ne.s32.totalorder %s134, %s137
      %p146 = scmp.eq.s32.totalorder %s19, 1
      %p147 = por %p145, %p146
      %p148 = scmp.ne.s32.totalorder %s137, %s138
      %p149 = scmp.eq.s32.totalorder %s19, 0
      %p150 = por %p148, %p149
      %p151 = scmp.ne.s32.totalorder %s137, %s138
      %p152 = scmp.eq.s32.totalorder %s20, 1
      %p153 = por %p151, %p152
      %p155 = scmp.ne.s32.totalorder %s138, %s154
      %p156 = scmp.eq.s32.totalorder %s20, 0
      %p157 = por %p155, %p156
      %p158 = scmp.le.s32.totalorder 1, %s14
      %p159 = scmp.lt.s32.totalorder %s14, 3
      %p160 = pnand %p158, %p159
      %p161 = pneg %p160
      // Predicated region
      $region9: #{tpu_custom_call.1} parent=5 // pred_check
        _
      $region10: #{tpu_custom_call.1} parent=5 // pred_check_branch
        %163 = sbr.rel (%p160) target = $region12
      $region11: #{tpu_custom_call.1} parent=5 // pred_region
        %s164 = ssub.s32 %s14, 1
        // Predicated region
        $region13: #{tpu_custom_call.1} parent=11 // pred_check
          %p165 = pneg %p61
        $region14: #{tpu_custom_call.1} parent=11 // pred_check_branch
          %167 = sbr.rel (%p165) target = $region16
        $region15: #{tpu_custom_call.1} parent=11 // pred_region
          _
        $region16: #{tpu_custom_call.1} parent=11 // pred_fallthru
          _
        // Predicated region
        $region17: #{tpu_custom_call.1} parent=11 // pred_check
          %p168 = pneg %p82
        $region18: #{tpu_custom_call.1} parent=11 // pred_check_branch
          %170 = sbr.rel (%p168) target = $region20
        $region19: #{tpu_custom_call.1} parent=11 // pred_region
          _
        $region20: #{tpu_custom_call.1} parent=11 // pred_fallthru
          _
        // Predicated region
        $region21: #{tpu_custom_call.1} parent=11 // pred_check
          %p171 = pneg %p103
        $region22: #{tpu_custom_call.1} parent=11 // pred_check_branch
          %173 = sbr.rel (%p171) target = $region24
        $region23: #{tpu_custom_call.1} parent=11 // pred_region
          _
        $region24: #{tpu_custom_call.1} parent=11 // pred_fallthru
          _
        // Predicated region
        $region25: #{tpu_custom_call.1} parent=11 // pred_check
          %p174 = pneg %p124
        $region26: #{tpu_custom_call.1} parent=11 // pred_check_branch
          %176 = sbr.rel (%p174) target = $region28
        $region27: #{tpu_custom_call.1} parent=11 // pred_region
          _
        $region28: #{tpu_custom_call.1} parent=11 // pred_fallthru
          _
      $region12: #{tpu_custom_call.1} parent=5 // pred_fallthru
        _
      %p177 = scmp.lt.s32.totalorder %s14, 2
      // Predicated region
      $region29: #{tpu_custom_call.1} parent=5 // pred_check
        %p178 = pneg %p177
      $region30: #{tpu_custom_call.1} parent=5 // pred_check_branch
        %180 = sbr.rel (%p178) target = $region32
      $region31: #{tpu_custom_call.1} parent=5 // pred_region
        // Predicated region
        $region33: #{tpu_custom_call.1} parent=31 // pred_check
          %p181 = pneg %p34
        $region34: #{tpu_custom_call.1} parent=31 // pred_check_branch
          %183 = sbr.rel (%p181) target = $region36
        $region35: #{tpu_custom_call.1} parent=31 // pred_region
          %p184 = scmp.lt.s32.totalorder %s14, 1
          %s185 = scalar_select %p184, %s14, 1
          %s186 = smul.addr %s185, 51
          %s187 = smul.addr %s186, 8
          %s188 = scalar_lea.vmem %s0, %s187
        $region36: #{tpu_custom_call.1} parent=31 // pred_fallthru
          _
      $region32: #{tpu_custom_call.1} parent=5 // pred_fallthru
        _
      %p189 = scmp.le.s32.totalorder 1, %s14
      %p190 = scmp.lt.s32.totalorder %s14, 3
      %p191 = pnand %p189, %p190
      %p192 = pneg %p191
      // Predicated region
      $region37: #{tpu_custom_call.1} parent=5 // pred_check
        _
      $region38: #{tpu_custom_call.1} parent=5 // pred_check_branch
        %194 = sbr.rel (%p191) target = $region40
      $region39: #{tpu_custom_call.1} parent=5 // pred_region
        %s195 = ssub.s32 %s14, 1
        %p196 = scmp.lt.s32.totalorder %s19, 1
        %s197 = scalar_select %p196, %s19, 1
        %s198 = smul.addr %s197, 51
        %s199 = smul.addr %s198, 8
        %s200 = scalar_lea.vmem %s0, %s199
        %p201 = pneg %p40
        %p202 = pneg %p37
        %p203 = pneg %p61
        %p204 = pneg %p58
        %p205 = pneg %p82
        %p206 = pneg %p79
        %p207 = pneg %p103
        %p208 = pneg %p100
        %p209 = pneg %p124
        %p210 = pneg %p121
        %p211 = pneg %p150
        %p212 = pneg %p147
        %s213 = sand.u32 %s137, 1
        %s214 = scalar_lea.sflag [#allocation5], %s213
        %s215 = sand.u32 %s137, 1
        %s216 = scalar_lea.vmem [#allocation4], %s215
        %p217 = scmp.lt.s32.totalorder %s19, 1
        %s218 = scalar_select %p217, %s19, 1
        %s219 = smul.addr %s218, 51
        %s220 = smul.addr %s219, 8
        %s221 = scalar_lea.vmem %s0, %s220
        %vm222 = vcmask 1043744
        %223 = vst.msk [vmem:[#allocation3] sm:$0xf] %vm222, 0.0
        %224 = vst.msk [vmem:[#allocation3 + $0x4] sm:$0xf] %vm222, 0.0
        %225 = vst.msk [vmem:[#allocation3 + $0x8] sm:$0xf] %vm222, 0.0
        %226 = vst.msk [vmem:[#allocation3 + $0xc] sm:$0xf] %vm222, 0.0
        %v227 = vld [vmem:[%s1] sm:$0xff]
        %v228 = vld [vmem:[%s1 + $0x8] sm:$0xff]
        %v229 = vld [vmem:[%s1 + $0x10] sm:$0xff]
        %v230 = vld [vmem:[%s1 + $0x18] sm:$0xff]
        %v231 = vld [vmem:[%s1 + $0x20] sm:$0xff]
        %v232 = vld [vmem:[%s1 + $0x28] sm:$0xff]
        %v233 = vld [vmem:[%s1 + $0x30] sm:$0xff]
        %v234 = vld [vmem:[%s1 + $0x38] sm:$0xff]
        %v235 = vld [vmem:[%s1 + $0x40] sm:$0xff]
        %v236 = vld [vmem:[%s1 + $0x48] sm:$0xff]
        %v237 = vld [vmem:[%s1 + $0x50] sm:$0xff]
        %v238 = vld [vmem:[%s1 + $0x58] sm:$0xff]
        %v239 = vld [vmem:[%s1 + $0x60] sm:$0xff]
        %v240 = vld [vmem:[%s1 + $0x68] sm:$0xff]
        %v241 = vld [vmem:[%s1 + $0x70] sm:$0xff]
        %v242 = vld [vmem:[%s1 + $0x78] sm:$0xff]
        %v243 = vld [vmem:[%s221] ss:$4 sm:$0xf]
        %s244 = scalar_lea.vmem %s221, 96
        %v245 = vld [vmem:[%s244] ss:$4 sm:$0xf]
        %s246 = scalar_lea.vmem %s221, 192
        %v247 = vld [vmem:[%s246] ss:$4 sm:$0xf]
        %s248 = scalar_lea.vmem %s221, 288
        %v249 = vld [vmem:[%s248] ss:$4 sm:$0xf]
        %vm250 = vcmask 27648
        %251 = vst.msk [vmem:[#allocation3] sm:$0xf] %vm250, %v243
        %252 = vst.msk [vmem:[#allocation3 + $0x4] sm:$0xf] %vm250, %v245
        %253 = vst.msk [vmem:[#allocation3 + $0x8] sm:$0xf] %vm250, %v247
        %254 = vst.msk [vmem:[#allocation3 + $0xc] sm:$0xf] %vm250, %v249
        %s255 = scalar_lea.vmem %s221, 1
        %v256 = vld [vmem:[%s255] ss:$4 sm:$0xf]
        %s257 = scalar_lea.vmem %s221, 97
        %v258 = vld [vmem:[%s257] ss:$4 sm:$0xf]
        %s259 = scalar_lea.vmem %s221, 193
        %v260 = vld [vmem:[%s259] ss:$4 sm:$0xf]
        %s261 = scalar_lea.vmem %s221, 289
        %v262 = vld [vmem:[%s261] ss:$4 sm:$0xf]
        %267 = vrot.lane.b32.xlu0 %v256, 4
        %v268 = vpop.permute.xlu0 %267
        %269 = vrot.lane.b32.xlu0 %v258, 4
        %v270 = vpop.permute.xlu0 %269
        %271 = vrot.lane.b32.xlu0 %v260, 4
        %v272 = vpop.permute.xlu0 %271
        %273 = vrot.lane.b32.xlu0 %v262, 4
        %v274 = vpop.permute.xlu0 %273
        %vm279 = vcmask 60448
        %280 = vst.msk [vmem:[#allocation3] sm:$0xf] %vm279, %v268
        %281 = vst.msk [vmem:[#allocation3 + $0x4] sm:$0xf] %vm279, %v270
        %282 = vst.msk [vmem:[#allocation3 + $0x8] sm:$0xf] %vm279, %v272
        %283 = vst.msk [vmem:[#allocation3 + $0xc] sm:$0xf] %vm279, %v274
        %s284 = scalar_lea.vmem %s221, 2
        %v285 = vld [vmem:[%s284] ss:$4 sm:$0xf]
        %s286 = scalar_lea.vmem %s221, 98
        %v287 = vld [vmem:[%s286] ss:$4 sm:$0xf]
        %s288 = scalar_lea.vmem %s221, 194
        %v289 = vld [vmem:[%s288] ss:$4 sm:$0xf]
        %s290 = scalar_lea.vmem %s221, 290
        %v291 = vld [vmem:[%s290] ss:$4 sm:$0xf]
        %296 = vrot.lane.b32.xlu0 %v285, 8
        %v297 = vpop.permute.xlu0 %296
        %298 = vrot.lane.b32.xlu0 %v287, 8
        %v299 = vpop.permute.xlu0 %298
        %300 = vrot.lane.b32.xlu0 %v289, 8
        %v301 = vpop.permute.xlu0 %300
        %302 = vrot.lane.b32.xlu0 %v291, 8
        %v303 = vpop.permute.xlu0 %302
        %vm308 = vcmask 93248
        %309 = vst.msk [vmem:[#allocation3] sm:$0xf] %vm308, %v297
        %310 = vst.msk [vmem:[#allocation3 + $0x4] sm:$0xf] %vm308, %v299
        %311 = vst.msk [vmem:[#allocation3 + $0x8] sm:$0xf] %vm308, %v301
        %312 = vst.msk [vmem:[#allocation3 + $0xc] sm:$0xf] %vm308, %v303
        %s313 = scalar_lea.vmem %s221, 24
        %v314 = vld [vmem:[%s313] ss:$4 sm:$0xf]
        %s315 = scalar_lea.vmem %s313, 96
        %v316 = vld [vmem:[%s315] ss:$4 sm:$0xf]
        %s317 = scalar_lea.vmem %s313, 192
        %v318 = vld [vmem:[%s317] ss:$4 sm:$0xf]
        %s319 = scalar_lea.vmem %s313, 288
        %v320 = vld [vmem:[%s319] ss:$4 sm:$0xf]
        %325 = vrot.lane.b32.xlu0 %v314, 12
        %v326 = vpop.permute.xlu0 %325
        %327 = vrot.lane.b32.xlu0 %v316, 12
        %v328 = vpop.permute.xlu0 %327
        %329 = vrot.lane.b32.xlu0 %v318, 12
        %v330 = vpop.permute.xlu0 %329
        %331 = vrot.lane.b32.xlu0 %v320, 12
        %v332 = vpop.permute.xlu0 %331
        %vm337 = vcmask 126048
        %338 = vst.msk [vmem:[#allocation3] sm:$0xf] %vm337, %v326
        %339 = vst.msk [vmem:[#allocation3 + $0x4] sm:$0xf] %vm337, %v328
        %340 = vst.msk [vmem:[#allocation3 + $0x8] sm:$0xf] %vm337, %v330
        %341 = vst.msk [vmem:[#allocation3 + $0xc] sm:$0xf] %vm337, %v332
        %s342 = scalar_lea.vmem %s313, 1
        %v343 = vld [vmem:[%s342] ss:$4 sm:$0xf]
        %s344 = scalar_lea.vmem %s313, 97
        %v345 = vld [vmem:[%s344] ss:$4 sm:$0xf]
        %s346 = scalar_lea.vmem %s313, 193
        %v347 = vld [vmem:[%s346] ss:$4 sm:$0xf]
        %s348 = scalar_lea.vmem %s313, 289
        %v349 = vld [vmem:[%s348] ss:$4 sm:$0xf]
        %354 = vrot.lane.b32.xlu0 %v343, 16
        %v355 = vpop.permute.xlu0 %354
        %356 = vrot.lane.b32.xlu0 %v345, 16
        %v357 = vpop.permute.xlu0 %356
        %358 = vrot.lane.b32.xlu0 %v347, 16
        %v359 = vpop.permute.xlu0 %358
        %360 = vrot.lane.b32.xlu0 %v349, 16
        %v361 = vpop.permute.xlu0 %360
        %vm366 = vcmask 158848
        %367 = vst.msk [vmem:[#allocation3] sm:$0xf] %vm366, %v355
        %368 = vst.msk [vmem:[#allocation3 + $0x4] sm:$0xf] %vm366, %v357
        %369 = vst.msk [vmem:[#allocation3 + $0x8] sm:$0xf] %vm366, %v359
        %370 = vst.msk [vmem:[#allocation3 + $0xc] sm:$0xf] %vm366, %v361
        %s371 = scalar_lea.vmem %s313, 2
        %v372 = vld [vmem:[%s371] ss:$4 sm:$0xf]
        %s373 = scalar_lea.vmem %s313, 98
        %v374 = vld [vmem:[%s373] ss:$4 sm:$0xf]
        %s375 = scalar_lea.vmem %s313, 194
        %v376 = vld [vmem:[%s375] ss:$4 sm:$0xf]
        %s377 = scalar_lea.vmem %s313, 290
        %v378 = vld [vmem:[%s377] ss:$4 sm:$0xf]
        %383 = vrot.lane.b32.xlu0 %v372, 20
        %v384 = vpop.permute.xlu0 %383
        %385 = vrot.lane.b32.xlu0 %v374, 20
        %v386 = vpop.permute.xlu0 %385
        %387 = vrot.lane.b32.xlu0 %v376, 20
        %v388 = vpop.permute.xlu0 %387
        %389 = vrot.lane.b32.xlu0 %v378, 20
        %v390 = vpop.permute.xlu0 %389
        %vm395 = vcmask 191648
        %396 = vst.msk [vmem:[#allocation3] sm:$0xf] %vm395, %v384
        %397 = vst.msk [vmem:[#allocation3 + $0x4] sm:$0xf] %vm395, %v386
        %398 = vst.msk [vmem:[#allocation3 + $0x8] sm:$0xf] %vm395, %v388
        %399 = vst.msk [vmem:[#allocation3 + $0xc] sm:$0xf] %vm395, %v390
        %s400 = scalar_lea.vmem %s221, 48
        %v401 = vld [vmem:[%s400] ss:$4 sm:$0xf]
        %s402 = scalar_lea.vmem %s400, 96
        %v403 = vld [vmem:[%s402] ss:$4 sm:$0xf]
        %s404 = scalar_lea.vmem %s400, 192
        %v405 = vld [vmem:[%s404] ss:$4 sm:$0xf]
        %s406 = scalar_lea.vmem %s400, 288
        %v407 = vld [vmem:[%s406] ss:$4 sm:$0xf]
        %412 = vrot.lane.b32.xlu0 %v401, 24
        %v413 = vpop.permute.xlu0 %412
        %414 = vrot.lane.b32.xlu0 %v403, 24
        %v415 = vpop.permute.xlu0 %414
        %416 = vrot.lane.b32.xlu0 %v405, 24
        %v417 = vpop.permute.xlu0 %416
        %418 = vrot.lane.b32.xlu0 %v407, 24
        %v419 = vpop.permute.xlu0 %418
        %vm424 = vcmask 224448
        %425 = vst.msk [vmem:[#allocation3] sm:$0xf] %vm424, %v413
        %426 = vst.msk [vmem:[#allocation3 + $0x4] sm:$0xf] %vm424, %v415
        %427 = vst.msk [vmem:[#allocation3 + $0x8] sm:$0xf] %vm424, %v417
        %428 = vst.msk [vmem:[#allocation3 + $0xc] sm:$0xf] %vm424, %v419
        %s429 = scalar_lea.vmem %s400, 1
        %v430 = vld [vmem:[%s429] ss:$4 sm:$0xf]
        %s431 = scalar_lea.vmem %s400, 97
        %v432 = vld [vmem:[%s431] ss:$4 sm:$0xf]
        %s433 = scalar_lea.vmem %s400, 193
        %v434 = vld [vmem:[%s433] ss:$4 sm:$0xf]
        %s435 = scalar_lea.vmem %s400, 289
        %v436 = vld [vmem:[%s435] ss:$4 sm:$0xf]
        %441 = vrot.lane.b32.xlu0 %v430, 28
        %v442 = vpop.permute.xlu0 %441
        %443 = vrot.lane.b32.xlu0 %v432, 28
        %v444 = vpop.permute.xlu0 %443
        %445 = vrot.lane.b32.xlu0 %v434, 28
        %v446 = vpop.permute.xlu0 %445
        %447 = vrot.lane.b32.xlu0 %v436, 28
        %v448 = vpop.permute.xlu0 %447
        %vm453 = vcmask 257248
        %454 = vst.msk [vmem:[#allocation3] sm:$0xf] %vm453, %v442
        %455 = vst.msk [vmem:[#allocation3 + $0x4] sm:$0xf] %vm453, %v444
        %456 = vst.msk [vmem:[#allocation3 + $0x8] sm:$0xf] %vm453, %v446
        %457 = vst.msk [vmem:[#allocation3 + $0xc] sm:$0xf] %vm453, %v448
        %s458 = scalar_lea.vmem %s400, 2
        %v459 = vld [vmem:[%s458] ss:$4 sm:$0xf]
        %s460 = scalar_lea.vmem %s400, 98
        %v461 = vld [vmem:[%s460] ss:$4 sm:$0xf]
        %s462 = scalar_lea.vmem %s400, 194
        %v463 = vld [vmem:[%s462] ss:$4 sm:$0xf]
        %s464 = scalar_lea.vmem %s400, 290
        %v465 = vld [vmem:[%s464] ss:$4 sm:$0xf]
        %470 = vrot.lane.b32.xlu0 %v459, 32
        %v471 = vpop.permute.xlu0 %470
        %472 = vrot.lane.b32.xlu0 %v461, 32
        %v473 = vpop.permute.xlu0 %472
        %474 = vrot.lane.b32.xlu0 %v463, 32
        %v475 = vpop.permute.xlu0 %474
        %476 = vrot.lane.b32.xlu0 %v465, 32
        %v477 = vpop.permute.xlu0 %476
        %vm482 = vcmask 290048
        %483 = vst.msk [vmem:[#allocation3] sm:$0xf] %vm482, %v471
        %484 = vst.msk [vmem:[#allocation3 + $0x4] sm:$0xf] %vm482, %v473
        %485 = vst.msk [vmem:[#allocation3 + $0x8] sm:$0xf] %vm482, %v475
        %486 = vst.msk [vmem:[#allocation3 + $0xc] sm:$0xf] %vm482, %v477
        %v487 = vld [vmem:[#allocation3] sm:$0xf]
        %v488 = vld [vmem:[#allocation3 + $0x4] sm:$0xf]
        %v489 = vld [vmem:[#allocation3 + $0x8] sm:$0xf]
        %v490 = vld [vmem:[#allocation3 + $0xc] sm:$0xf]
        %495 = vst [vmem:[#allocation1] ss:$2 sm:$0xff] %v487
        %s496 = scalar_lea.vmem [#allocation1], 1
        %497 = vst [vmem:[%s496] ss:$2 sm:$0xff] %v488
        %s498 = scalar_lea.vmem [#allocation1], 16
        %499 = vst [vmem:[%s498] ss:$2 sm:$0xff] %v489
        %s500 = scalar_lea.vmem [#allocation1], 17
        %501 = vst [vmem:[%s500] ss:$2 sm:$0xff] %v490
        %v502 = vld.sshfl [vmem:[#allocation1] sm:$0xff pattern:$0x75316420]
        %v503 = vld.sshfl [vmem:[#allocation1 + $0x10] sm:$0xff pattern:$0x75316420]
        %506 = vmatpush.msra.mxu0 %v242
        %507 = vmatpush.msra.mxu0 %v241
        %508 = vmatpush.msra.mxu0 %v240
        %509 = vmatpush.msra.mxu0 %v239
        %510 = vmatpush.msra.mxu0 %v238
        %511 = vmatpush.msra.mxu0 %v237
        %512 = vmatpush.msra.mxu0 %v236
        %513 = vmatpush.msra.mxu0 %v235
        %514 = vmatpush.msra.mxu0 %v234
        %515 = vmatpush.msra.mxu0 %v233
        %516 = vmatpush.msra.mxu0 %v232
        %517 = vmatpush.msra.mxu0 %v231
        %518 = vmatpush.msra.mxu0 %v230
        %519 = vmatpush.msra.mxu0 %v229
        %520 = vmatpush.msra.mxu0 %v228
        %521 = vmatpush.msra.mxu0 %v227
        %522 = vmatmul.f32.gmra.mxu0 %v502
        %v523 = vpop.f32.mrf.mxu0
        %v524 = vadd.f32 0.0, %v523
        %525 = vmatmul.f32.gmra.mxu0 %v503
        %v526 = vpop.f32.mrf.mxu0
        %v527 = vadd.f32 0.0, %v526
        %528 = vdwg.mxu0
        %v529 = vld [vmem:[%s284] ss:$4 sm:$0xf]
        %v530 = vld [vmem:[%s286] ss:$4 sm:$0xf]
        %v531 = vld [vmem:[%s288] ss:$4 sm:$0xf]
        %v532 = vld [vmem:[%s290] ss:$4 sm:$0xf]
        %533 = vst.msk [vmem:[#allocation3] sm:$0xf] %vm250, %v529
        %534 = vst.msk [vmem:[#allocation3 + $0x4] sm:$0xf] %vm250, %v530
        %535 = vst.msk [vmem:[#allocation3 + $0x8] sm:$0xf] %vm250, %v531
        %536 = vst.msk [vmem:[#allocation3 + $0xc] sm:$0xf] %vm250, %v532
        %s537 = scalar_lea.vmem %s221, 3
        %v538 = vld [vmem:[%s537] ss:$4 sm:$0xf]
        %s539 = scalar_lea.vmem %s221, 99
        %v540 = vld [vmem:[%s539] ss:$4 sm:$0xf]
        %s541 = scalar_lea.vmem %s221, 195
        %v542 = vld [vmem:[%s541] ss:$4 sm:$0xf]
        %s543 = scalar_lea.vmem %s221, 291
        %v544 = vld [vmem:[%s543] ss:$4 sm:$0xf]
        %549 = vrot.lane.b32.xlu0 %v538, 4
        %v550 = vpop.permute.xlu0 %549
        %551 = vrot.lane.b32.xlu0 %v540, 4
        %v552 = vpop.permute.xlu0 %551
        %553 = vrot.lane.b32.xlu0 %v542, 4
        %v554 = vpop.permute.xlu0 %553
        %555 = vrot.lane.b32.xlu0 %v544, 4
        %v556 = vpop.permute.xlu0 %555
        %561 = vst.msk [vmem:[#allocation3] sm:$0xf] %vm279, %v550
        %562 = vst.msk [vmem:[#allocation3 + $0x4] sm:$0xf] %vm279, %v552
        %563 = vst.msk [vmem:[#allocation3 + $0x8] sm:$0xf] %vm279, %v554
        %564 = vst.msk [vmem:[#allocation3 + $0xc] sm:$0xf] %vm279, %v556
        %s565 = scalar_lea.vmem %s221, 4
        %v566 = vld [vmem:[%s565] ss:$4 sm:$0xf]
        %s567 = scalar_lea.vmem %s221, 100
        %v568 = vld [vmem:[%s567] ss:$4 sm:$0xf]
        %s569 = scalar_lea.vmem %s221, 196
        %v570 = vld [vmem:[%s569] ss:$4 sm:$0xf]
        %s571 = scalar_lea.vmem %s221, 292
        %v572 = vld [vmem:[%s571] ss:$4 sm:$0xf]
        %577 = vrot.lane.b32.xlu0 %v566, 8
        %v578 = vpop.permute.xlu0 %577
        %579 = vrot.lane.b32.xlu0 %v568, 8
        %v580 = vpop.permute.xlu0 %579
        %581 = vrot.lane.b32.xlu0 %v570, 8
        %v582 = vpop.permute.xlu0 %581
        %583 = vrot.lane.b32.xlu0 %v572, 8
        %v584 = vpop.permute.xlu0 %583
        %589 = vst.msk [vmem:[#allocation3] sm:$0xf] %vm308, %v578
        %590 = vst.msk [vmem:[#allocation3 + $0x4] sm:$0xf] %vm308, %v580
        %591 = vst.msk [vmem:[#allocation3 + $0x8] sm:$0xf] %vm308, %v582
        %592 = vst.msk [vmem:[#allocation3 + $0xc] sm:$0xf] %vm308, %v584
        %v593 = vld [vmem:[%s371] ss:$4 sm:$0xf]
        %v594 = vld [vmem:[%s373] ss:$4 sm:$0xf]
        %v595 = vld [vmem:[%s375] ss:$4 sm:$0xf]
        %v596 = vld [vmem:[%s377] ss:$4 sm:$0xf]
        %601 = vrot.lane.b32.xlu0 %v593, 12
        %v602 = vpop.permute.xlu0 %601
        %603 = vrot.lane.b32.xlu0 %v594, 12
        %v604 = vpop.permute.xlu0 %603
        %605 = vrot.lane.b32.xlu0 %v595, 12
        %v606 = vpop.permute.xlu0 %605
        %607 = vrot.lane.b32.xlu0 %v596, 12
        %v608 = vpop.permute.xlu0 %607
        %613 = vst.msk [vmem:[#allocation3] sm:$0xf] %vm337, %v602
        %614 = vst.msk [vmem:[#allocation3 + $0x4] sm:$0xf] %vm337, %v604
        %615 = vst.msk [vmem:[#allocation3 + $0x8] sm:$0xf] %vm337, %v606
        %616 = vst.msk [vmem:[#allocation3 + $0xc] sm:$0xf] %vm337, %v608
        %s617 = scalar_lea.vmem %s313, 3
        %v618 = vld [vmem:[%s617] ss:$4 sm:$0xf]
        %s619 = scalar_lea.vmem %s313, 99
        %v620 = vld [vmem:[%s619] ss:$4 sm:$0xf]
        %s621 = scalar_lea.vmem %s313, 195
        %v622 = vld [vmem:[%s621] ss:$4 sm:$0xf]
        %s623 = scalar_lea.vmem %s313, 291
        %v624 = vld [vmem:[%s623] ss:$4 sm:$0xf]
        %629 = vrot.lane.b32.xlu0 %v618, 16
        %v630 = vpop.permute.xlu0 %629
        %631 = vrot.lane.b32.xlu0 %v620, 16
        %v632 = vpop.permute.xlu0 %631
        %633 = vrot.lane.b32.xlu0 %v622, 16
        %v634 = vpop.permute.xlu0 %633
        %635 = vrot.lane.b32.xlu0 %v624, 16
        %v636 = vpop.permute.xlu0 %635
        %641 = vst.msk [vmem:[#allocation3] sm:$0xf] %vm366, %v630
        %642 = vst.msk [vmem:[#allocation3 + $0x4] sm:$0xf] %vm366, %v632
        %643 = vst.msk [vmem:[#allocation3 + $0x8] sm:$0xf] %vm366, %v634
        %644 = vst.msk [vmem:[#allocation3 + $0xc] sm:$0xf] %vm366, %v636
        %s645 = scalar_lea.vmem %s313, 4
        %v646 = vld [vmem:[%s645] ss:$4 sm:$0xf]
        %s647 = scalar_lea.vmem %s313, 100
        %v648 = vld [vmem:[%s647] ss:$4 sm:$0xf]
        %s649 = scalar_lea.vmem %s313, 196
        %v650 = vld [vmem:[%s649] ss:$4 sm:$0xf]
        %s651 = scalar_lea.vmem %s313, 292
        %v652 = vld [vmem:[%s651] ss:$4 sm:$0xf]
        %657 = vrot.lane.b32.xlu0 %v646, 20
        %v658 = vpop.permute.xlu0 %657
        %659 = vrot.lane.b32.xlu0 %v648, 20
        %v660 = vpop.permute.xlu0 %659
        %661 = vrot.lane.b32.xlu0 %v650, 20
        %v662 = vpop.permute.xlu0 %661
        %663 = vrot.lane.b32.xlu0 %v652, 20
        %v664 = vpop.permute.xlu0 %663
        %669 = vst.msk [vmem:[#allocation3] sm:$0xf] %vm395, %v658
        %670 = vst.msk [vmem:[#allocation3 + $0x4] sm:$0xf] %vm395, %v660
        %671 = vst.msk [vmem:[#allocation3 + $0x8] sm:$0xf] %vm395, %v662
        %672 = vst.msk [vmem:[#allocation3 + $0xc] sm:$0xf] %vm395, %v664
        %v673 = vld [vmem:[%s458] ss:$4 sm:$0xf]
        %v674 = vld [vmem:[%s460] ss:$4 sm:$0xf]
        %v675 = vld [vmem:[%s462] ss:$4 sm:$0xf]
        %v676 = vld [vmem:[%s464] ss:$4 sm:$0xf]
        %681 = vrot.lane.b32.xlu0 %v673, 24
        %v682 = vpop.permute.xlu0 %681
        %683 = vrot.lane.b32.xlu0 %v674, 24
        %v684 = vpop.permute.xlu0 %683
        %685 = vrot.lane.b32.xlu0 %v675, 24
        %v686 = vpop.permute.xlu0 %685
        %687 = vrot.lane.b32.xlu0 %v676, 24
        %v688 = vpop.permute.xlu0 %687
        %693 = vst.msk [vmem:[#allocation3] sm:$0xf] %vm424, %v682
        %694 = vst.msk [vmem:[#allocation3 + $0x4] sm:$0xf] %vm424, %v684
        %695 = vst.msk [vmem:[#allocation3 + $0x8] sm:$0xf] %vm424, %v686
        %696 = vst.msk [vmem:[#allocation3 + $0xc] sm:$0xf] %vm424, %v688
        %s697 = scalar_lea.vmem %s400, 3
        %v698 = vld [vmem:[%s697] ss:$4 sm:$0xf]
        %s699 = scalar_lea.vmem %s400, 99
        %v700 = vld [vmem:[%s699] ss:$4 sm:$0xf]
        %s701 = scalar_lea.vmem %s400, 195
        %v702 = vld [vmem:[%s701] ss:$4 sm:$0xf]
        %s703 = scalar_lea.vmem %s400, 291
        %v704 = vld [vmem:[%s703] ss:$4 sm:$0xf]
        %709 = vrot.lane.b32.xlu0 %v698, 28
        %v710 = vpop.permute.xlu0 %709
        %711 = vrot.lane.b32.xlu0 %v700, 28
        %v712 = vpop.permute.xlu0 %711
        %713 = vrot.lane.b32.xlu0 %v702, 28
        %v714 = vpop.permute.xlu0 %713
        %715 = vrot.lane.b32.xlu0 %v704, 28
        %v716 = vpop.permute.xlu0 %715
        %721 = vst.msk [vmem:[#allocation3] sm:$0xf] %vm453, %v710
        %722 = vst.msk [vmem:[#allocation3 + $0x4] sm:$0xf] %vm453, %v712
        %723 = vst.msk [vmem:[#allocation3 + $0x8] sm:$0xf] %vm453, %v714
        %724 = vst.msk [vmem:[#allocation3 + $0xc] sm:$0xf] %vm453, %v716
        %s725 = scalar_lea.vmem %s400, 4
        %v726 = vld [vmem:[%s725] ss:$4 sm:$0xf]
        %s727 = scalar_lea.vmem %s400, 100
        %v728 = vld [vmem:[%s727] ss:$4 sm:$0xf]
        %s729 = scalar_lea.vmem %s400, 196
        %v730 = vld [vmem:[%s729] ss:$4 sm:$0xf]
        %s731 = scalar_lea.vmem %s400, 292
        %v732 = vld [vmem:[%s731] ss:$4 sm:$0xf]
        %737 = vrot.lane.b32.xlu0 %v726, 32
        %v738 = vpop.permute.xlu0 %737
        %739 = vrot.lane.b32.xlu0 %v728, 32
        %v740 = vpop.permute.xlu0 %739
        %741 = vrot.lane.b32.xlu0 %v730, 32
        %v742 = vpop.permute.xlu0 %741
        %743 = vrot.lane.b32.xlu0 %v732, 32
        %v744 = vpop.permute.xlu0 %743
        %749 = vst.msk [vmem:[#allocation3] sm:$0xf] %vm482, %v738
        %750 = vst.msk [vmem:[#allocation3 + $0x4] sm:$0xf] %vm482, %v740
        %751 = vst.msk [vmem:[#allocation3 + $0x8] sm:$0xf] %vm482, %v742
        %752 = vst.msk [vmem:[#allocation3 + $0xc] sm:$0xf] %vm482, %v744
        %v753 = vld [vmem:[#allocation3] sm:$0xf]
        %v754 = vld [vmem:[#allocation3 + $0x4] sm:$0xf]
        %v755 = vld [vmem:[#allocation3 + $0x8] sm:$0xf]
        %v756 = vld [vmem:[#allocation3 + $0xc] sm:$0xf]
        %761 = vst [vmem:[#allocation1] ss:$2 sm:$0xff] %v753
        %s762 = scalar_lea.vmem [#allocation1], 1
        %763 = vst [vmem:[%s762] ss:$2 sm:$0xff] %v754
        %s764 = scalar_lea.vmem [#allocation1], 16
        %765 = vst [vmem:[%s764] ss:$2 sm:$0xff] %v755
        %s766 = scalar_lea.vmem [#allocation1], 17
        %767 = vst [vmem:[%s766] ss:$2 sm:$0xff] %v756
        %v768 = vld.sshfl [vmem:[#allocation1] sm:$0xff pattern:$0x75316420]
        %v769 = vld.sshfl [vmem:[#allocation1 + $0x10] sm:$0xff pattern:$0x75316420]
        %772 = vmatpush.msra.mxu0 %v242
        %773 = vmatpush.msra.mxu0 %v241
        %774 = vmatpush.msra.mxu0 %v240
        %775 = vmatpush.msra.mxu0 %v239
        %776 = vmatpush.msra.mxu0 %v238
        %777 = vmatpush.msra.mxu0 %v237
        %778 = vmatpush.msra.mxu0 %v236
        %779 = vmatpush.msra.mxu0 %v235
        %780 = vmatpush.msra.mxu0 %v234
        %781 = vmatpush.msra.mxu0 %v233
        %782 = vmatpush.msra.mxu0 %v232
        %783 = vmatpush.msra.mxu0 %v231
        %784 = vmatpush.msra.mxu0 %v230
        %785 = vmatpush.msra.mxu0 %v229
        %786 = vmatpush.msra.mxu0 %v228
        %787 = vmatpush.msra.mxu0 %v227
        %788 = vmatmul.f32.gmra.mxu0 %v768
        %v789 = vpop.f32.mrf.mxu0
        %v790 = vadd.f32 0.0, %v789
        %791 = vmatmul.f32.gmra.mxu0 %v769
        %v792 = vpop.f32.mrf.mxu0
        %v793 = vadd.f32 0.0, %v792
        %794 = vdwg.mxu0
        %v795 = vmax.f32 %v524, %v790
        %v796 = vmax.f32 %v527, %v793
        %v797 = vld [vmem:[%s400] ss:$4 sm:$0xf]
        %v798 = vld [vmem:[%s402] ss:$4 sm:$0xf]
        %v799 = vld [vmem:[%s404] ss:$4 sm:$0xf]
        %v800 = vld [vmem:[%s406] ss:$4 sm:$0xf]
        %801 = vst.msk [vmem:[#allocation3] sm:$0xf] %vm250, %v797
        %802 = vst.msk [vmem:[#allocation3 + $0x4] sm:$0xf] %vm250, %v798
        %803 = vst.msk [vmem:[#allocation3 + $0x8] sm:$0xf] %vm250, %v799
        %804 = vst.msk [vmem:[#allocation3 + $0xc] sm:$0xf] %vm250, %v800
        %v805 = vld [vmem:[%s429] ss:$4 sm:$0xf]
        %v806 = vld [vmem:[%s431] ss:$4 sm:$0xf]
        %v807 = vld [vmem:[%s433] ss:$4 sm:$0xf]
        %v808 = vld [vmem:[%s435] ss:$4 sm:$0xf]
        %813 = vrot.lane.b32.xlu0 %v805, 4
        %v814 = vpop.permute.xlu0 %813
        %815 = vrot.lane.b32.xlu0 %v806, 4
        %v816 = vpop.permute.xlu0 %815
        %817 = vrot.lane.b32.xlu0 %v807, 4
        %v818 = vpop.permute.xlu0 %817
        %819 = vrot.lane.b32.xlu0 %v808, 4
        %v820 = vpop.permute.xlu0 %819
        %825 = vst.msk [vmem:[#allocation3] sm:$0xf] %vm279, %v814
        %826 = vst.msk [vmem:[#allocation3 + $0x4] sm:$0xf] %vm279, %v816
        %827 = vst.msk [vmem:[#allocation3 + $0x8] sm:$0xf] %vm279, %v818
        %828 = vst.msk [vmem:[#allocation3 + $0xc] sm:$0xf] %vm279, %v820
        %v829 = vld [vmem:[%s458] ss:$4 sm:$0xf]
        %v830 = vld [vmem:[%s460] ss:$4 sm:$0xf]
        %v831 = vld [vmem:[%s462] ss:$4 sm:$0xf]
        %v832 = vld [vmem:[%s464] ss:$4 sm:$0xf]
        %837 = vrot.lane.b32.xlu0 %v829, 8
        %v838 = vpop.permute.xlu0 %837
        %839 = vrot.lane.b32.xlu0 %v830, 8
        %v840 = vpop.permute.xlu0 %839
        %841 = vrot.lane.b32.xlu0 %v831, 8
        %v842 = vpop.permute.xlu0 %841
        %843 = vrot.lane.b32.xlu0 %v832, 8
        %v844 = vpop.permute.xlu0 %843
        %849 = vst.msk [vmem:[#allocation3] sm:$0xf] %vm308, %v838
        %850 = vst.msk [vmem:[#allocation3 + $0x4] sm:$0xf] %vm308, %v840
        %851 = vst.msk [vmem:[#allocation3 + $0x8] sm:$0xf] %vm308, %v842
        %852 = vst.msk [vmem:[#allocation3 + $0xc] sm:$0xf] %vm308, %v844
        %s853 = scalar_lea.vmem %s221, 72
        %v854 = vld [vmem:[%s853] ss:$4 sm:$0xf]
        %s855 = scalar_lea.vmem %s853, 96
        %v856 = vld [vmem:[%s855] ss:$4 sm:$0xf]
        %s857 = scalar_lea.vmem %s853, 192
        %v858 = vld [vmem:[%s857] ss:$4 sm:$0xf]
        %s859 = scalar_lea.vmem %s853, 288
        %v860 = vld [vmem:[%s859] ss:$4 sm:$0xf]
        %865 = vrot.lane.b32.xlu0 %v854, 12
        %v866 = vpop.permute.xlu0 %865
        %867 = vrot.lane.b32.xlu0 %v856, 12
        %v868 = vpop.permute.xlu0 %867
        %869 = vrot.lane.b32.xlu0 %v858, 12
        %v870 = vpop.permute.xlu0 %869
        %871 = vrot.lane.b32.xlu0 %v860, 12
        %v872 = vpop.permute.xlu0 %871
        %877 = vst.msk [vmem:[#allocation3] sm:$0xf] %vm337, %v866
        %878 = vst.msk [vmem:[#allocation3 + $0x4] sm:$0xf] %vm337, %v868
        %879 = vst.msk [vmem:[#allocation3 + $0x8] sm:$0xf] %vm337, %v870
        %880 = vst.msk [vmem:[#allocation3 + $0xc] sm:$0xf] %vm337, %v872
        %s881 = scalar_lea.vmem %s853, 1
        %v882 = vld [vmem:[%s881] ss:$4 sm:$0xf]
        %s883 = scalar_lea.vmem %s853, 97
        %v884 = vld [vmem:[%s883] ss:$4 sm:$0xf]
        %s885 = scalar_lea.vmem %s853, 193
        %v886 = vld [vmem:[%s885] ss:$4 sm:$0xf]
        %s887 = scalar_lea.vmem %s853, 289
        %v888 = vld [vmem:[%s887] ss:$4 sm:$0xf]
        %893 = vrot.lane.b32.xlu0 %v882, 16
        %v894 = vpop.permute.xlu0 %893
        %895 = vrot.lane.b32.xlu0 %v884, 16
        %v896 = vpop.permute.xlu0 %895
        %897 = vrot.lane.b32.xlu0 %v886, 16
        %v898 = vpop.permute.xlu0 %897
        %899 = vrot.lane.b32.xlu0 %v888, 16
        %v900 = vpop.permute.xlu0 %899
        %905 = vst.msk [vmem:[#allocation3] sm:$0xf] %vm366, %v894
        %906 = vst.msk [vmem:[#allocation3 + $0x4] sm:$0xf] %vm366, %v896
        %907 = vst.msk [vmem:[#allocation3 + $0x8] sm:$0xf] %vm366, %v898
        %908 = vst.msk [vmem:[#allocation3 + $0xc] sm:$0xf] %vm366, %v900
        %s909 = scalar_lea.vmem %s853, 2
        %v910 = vld [vmem:[%s909] ss:$4 sm:$0xf]
        %s911 = scalar_lea.vmem %s853, 98
        %v912 = vld [vmem:[%s911] ss:$4 sm:$0xf]
        %s913 = scalar_lea.vmem %s853, 194
        %v914 = vld [vmem:[%s913] ss:$4 sm:$0xf]
        %s915 = scalar_lea.vmem %s853, 290
        %v916 = vld [vmem:[%s915] ss:$4 sm:$0xf]
        %921 = vrot.lane.b32.xlu0 %v910, 20
        %v922 = vpop.permute.xlu0 %921
        %923 = vrot.lane.b32.xlu0 %v912, 20
        %v924 = vpop.permute.xlu0 %923
        %925 = vrot.lane.b32.xlu0 %v914, 20
        %v926 = vpop.permute.xlu0 %925
        %927 = vrot.lane.b32.xlu0 %v916, 20
        %v928 = vpop.permute.xlu0 %927
        %933 = vst.msk [vmem:[#allocation3] sm:$0xf] %vm395, %v922
        %934 = vst.msk [vmem:[#allocation3 + $0x4] sm:$0xf] %vm395, %v924
        %935 = vst.msk [vmem:[#allocation3 + $0x8] sm:$0xf] %vm395, %v926
        %936 = vst.msk [vmem:[#allocation3 + $0xc] sm:$0xf] %vm395, %v928
        %s937 = scalar_lea.vmem %s221, 96
        %v938 = vld [vmem:[%s937] ss:$4 sm:$0xf]
        %s939 = scalar_lea.vmem %s937, 96
        %v940 = vld [vmem:[%s939] ss:$4 sm:$0xf]
        %s941 = scalar_lea.vmem %s937, 192
        %v942 = vld [vmem:[%s941] ss:$4 sm:$0xf]
        %s943 = scalar_lea.vmem %s937, 288
        %v944 = vld [vmem:[%s943] ss:$4 sm:$0xf]
        %949 = vrot.lane.b32.xlu0 %v938, 24
        %v950 = vpop.permute.xlu0 %949
        %951 = vrot.lane.b32.xlu0 %v940, 24
        %v952 = vpop.permute.xlu0 %951
        %953 = vrot.lane.b32.xlu0 %v942, 24
        %v954 = vpop.permute.xlu0 %953
        %955 = vrot.lane.b32.xlu0 %v944, 24
        %v956 = vpop.permute.xlu0 %955
        %961 = vst.msk [vmem:[#allocation3] sm:$0xf] %vm424, %v950
        %962 = vst.msk [vmem:[#allocation3 + $0x4] sm:$0xf] %vm424, %v952
        %963 = vst.msk [vmem:[#allocation3 + $0x8] sm:$0xf] %vm424, %v954
        %964 = vst.msk [vmem:[#allocation3 + $0xc] sm:$0xf] %vm424, %v956
        %s965 = scalar_lea.vmem %s937, 1
        %v966 = vld [vmem:[%s965] ss:$4 sm:$0xf]
        %s967 = scalar_lea.vmem %s937, 97
        %v968 = vld [vmem:[%s967] ss:$4 sm:$0xf]
        %s969 = scalar_lea.vmem %s937, 193
        %v970 = vld [vmem:[%s969] ss:$4 sm:$0xf]
        %s971 = scalar_lea.vmem %s937, 289
        %v972 = vld [vmem:[%s971] ss:$4 sm:$0xf]
        %977 = vrot.lane.b32.xlu0 %v966, 28
        %v978 = vpop.permute.xlu0 %977
        %979 = vrot.lane.b32.xlu0 %v968, 28
        %v980 = vpop.permute.xlu0 %979
        %981 = vrot.lane.b32.xlu0 %v970, 28
        %v982 = vpop.permute.xlu0 %981
        %983 = vrot.lane.b32.xlu0 %v972, 28
        %v984 = vpop.permute.xlu0 %983
        %989 = vst.msk [vmem:[#allocation3] sm:$0xf] %vm453, %v978
        %990 = vst.msk [vmem:[#allocation3 + $0x4] sm:$0xf] %vm453, %v980
        %991 = vst.msk [vmem:[#allocation3 + $0x8] sm:$0xf] %vm453, %v982
        %992 = vst.msk [vmem:[#allocation3 + $0xc] sm:$0xf] %vm453, %v984
        %s993 = scalar_lea.vmem %s937, 2
        %v994 = vld [vmem:[%s993] ss:$4 sm:$0xf]
        %s995 = scalar_lea.vmem %s937, 98
        %v996 = vld [vmem:[%s995] ss:$4 sm:$0xf]
        %s997 = scalar_lea.vmem %s937, 194
        %v998 = vld [vmem:[%s997] ss:$4 sm:$0xf]
        %s999 = scalar_lea.vmem %s937, 290
        %v1000 = vld [vmem:[%s999] ss:$4 sm:$0xf]
        %1005 = vrot.lane.b32.xlu0 %v994, 32
        %v1006 = vpop.permute.xlu0 %1005
        %1007 = vrot.lane.b32.xlu0 %v996, 32
        %v1008 = vpop.permute.xlu0 %1007
        %1009 = vrot.lane.b32.xlu0 %v998, 32
        %v1010 = vpop.permute.xlu0 %1009
        %1011 = vrot.lane.b32.xlu0 %v1000, 32
        %v1012 = vpop.permute.xlu0 %1011
        %1017 = vst.msk [vmem:[#allocation3] sm:$0xf] %vm482, %v1006
        %1018 = vst.msk [vmem:[#allocation3 + $0x4] sm:$0xf] %vm482, %v1008
        %1019 = vst.msk [vmem:[#allocation3 + $0x8] sm:$0xf] %vm482, %v1010
        %1020 = vst.msk [vmem:[#allocation3 + $0xc] sm:$0xf] %vm482, %v1012
        %v1021 = vld [vmem:[#allocation3] sm:$0xf]
        %v1022 = vld [vmem:[#allocation3 + $0x4] sm:$0xf]
        %v1023 = vld [vmem:[#allocation3 + $0x8] sm:$0xf]
        %v1024 = vld [vmem:[#allocation3 + $0xc] sm:$0xf]
        %1029 = vst [vmem:[#allocation1] ss:$2 sm:$0xff] %v1021
        %s1030 = scalar_lea.vmem [#allocation1], 1
        %1031 = vst [vmem:[%s1030] ss:$2 sm:$0xff] %v1022
        %s1032 = scalar_lea.vmem [#allocation1], 16
        %1033 = vst [vmem:[%s1032] ss:$2 sm:$0xff] %v1023
        %s1034 = scalar_lea.vmem [#allocation1], 17
        %1035 = vst [vmem:[%s1034] ss:$2 sm:$0xff] %v1024
        %v1036 = vld.sshfl [vmem:[#allocation1] sm:$0xff pattern:$0x75316420]
        %v1037 = vld.sshfl [vmem:[#allocation1 + $0x10] sm:$0xff pattern:$0x75316420]
        %1040 = vmatpush.msra.mxu0 %v242
        %1041 = vmatpush.msra.mxu0 %v241
        %1042 = vmatpush.msra.mxu0 %v240
        %1043 = vmatpush.msra.mxu0 %v239
        %1044 = vmatpush.msra.mxu0 %v238
        %1045 = vmatpush.msra.mxu0 %v237
        %1046 = vmatpush.msra.mxu0 %v236
        %1047 = vmatpush.msra.mxu0 %v235
        %1048 = vmatpush.msra.mxu0 %v234
        %1049 = vmatpush.msra.mxu0 %v233
        %1050 = vmatpush.msra.mxu0 %v232
        %1051 = vmatpush.msra.mxu0 %v231
        %1052 = vmatpush.msra.mxu0 %v230
        %1053 = vmatpush.msra.mxu0 %v229
        %1054 = vmatpush.msra.mxu0 %v228
        %1055 = vmatpush.msra.mxu0 %v227
        %1056 = vmatmul.f32.gmra.mxu0 %v1036
        %v1057 = vpop.f32.mrf.mxu0
        %v1058 = vadd.f32 0.0, %v1057
        %1059 = vmatmul.f32.gmra.mxu0 %v1037
        %v1060 = vpop.f32.mrf.mxu0
        %v1061 = vadd.f32 0.0, %v1060
        %1062 = vdwg.mxu0
        %v1063 = vmax.f32 %v795, %v1058
        %v1064 = vmax.f32 %v796, %v1061
        %v1065 = vld [vmem:[%s458] ss:$4 sm:$0xf]
        %v1066 = vld [vmem:[%s460] ss:$4 sm:$0xf]
        %v1067 = vld [vmem:[%s462] ss:$4 sm:$0xf]
        %v1068 = vld [vmem:[%s464] ss:$4 sm:$0xf]
        %1069 = vst.msk [vmem:[#allocation3] sm:$0xf] %vm250, %v1065
        %1070 = vst.msk [vmem:[#allocation3 + $0x4] sm:$0xf] %vm250, %v1066
        %1071 = vst.msk [vmem:[#allocation3 + $0x8] sm:$0xf] %vm250, %v1067
        %1072 = vst.msk [vmem:[#allocation3 + $0xc] sm:$0xf] %vm250, %v1068
        %v1073 = vld [vmem:[%s697] ss:$4 sm:$0xf]
        %v1074 = vld [vmem:[%s699] ss:$4 sm:$0xf]
        %v1075 = vld [vmem:[%s701] ss:$4 sm:$0xf]
        %v1076 = vld [vmem:[%s703] ss:$4 sm:$0xf]
        %1081 = vrot.lane.b32.xlu0 %v1073, 4
        %v1082 = vpop.permute.xlu0 %1081
        %1083 = vrot.lane.b32.xlu0 %v1074, 4
        %v1084 = vpop.permute.xlu0 %1083
        %1085 = vrot.lane.b32.xlu0 %v1075, 4
        %v1086 = vpop.permute.xlu0 %1085
        %1087 = vrot.lane.b32.xlu0 %v1076, 4
        %v1088 = vpop.permute.xlu0 %1087
        %1093 = vst.msk [vmem:[#allocation3] sm:$0xf] %vm279, %v1082
        %1094 = vst.msk [vmem:[#allocation3 + $0x4] sm:$0xf] %vm279, %v1084
        %1095 = vst.msk [vmem:[#allocation3 + $0x8] sm:$0xf] %vm279, %v1086
        %1096 = vst.msk [vmem:[#allocation3 + $0xc] sm:$0xf] %vm279, %v1088
        %v1097 = vld [vmem:[%s725] ss:$4 sm:$0xf]
        %v1098 = vld [vmem:[%s727] ss:$4 sm:$0xf]
        %v1099 = vld [vmem:[%s729] ss:$4 sm:$0xf]
        %v1100 = vld [vmem:[%s731] ss:$4 sm:$0xf]
        %1105 = vrot.lane.b32.xlu0 %v1097, 8
        %v1106 = vpop.permute.xlu0 %1105
        %1107 = vrot.lane.b32.xlu0 %v1098, 8
        %v1108 = vpop.permute.xlu0 %1107
        %1109 = vrot.lane.b32.xlu0 %v1099, 8
        %v1110 = vpop.permute.xlu0 %1109
        %1111 = vrot.lane.b32.xlu0 %v1100, 8
        %v1112 = vpop.permute.xlu0 %1111
        %1117 = vst.msk [vmem:[#allocation3] sm:$0xf] %vm308, %v1106
        %1118 = vst.msk [vmem:[#allocation3 + $0x4] sm:$0xf] %vm308, %v1108
        %1119 = vst.msk [vmem:[#allocation3 + $0x8] sm:$0xf] %vm308, %v1110
        %1120 = vst.msk [vmem:[#allocation3 + $0xc] sm:$0xf] %vm308, %v1112
        %v1121 = vld [vmem:[%s909] ss:$4 sm:$0xf]
        %v1122 = vld [vmem:[%s911] ss:$4 sm:$0xf]
        %v1123 = vld [vmem:[%s913] ss:$4 sm:$0xf]
        %v1124 = vld [vmem:[%s915] ss:$4 sm:$0xf]
        %1129 = vrot.lane.b32.xlu0 %v1121, 12
        %v1130 = vpop.permute.xlu0 %1129
        %1131 = vrot.lane.b32.xlu0 %v1122, 12
        %v1132 = vpop.permute.xlu0 %1131
        %1133 = vrot.lane.b32.xlu0 %v1123, 12
        %v1134 = vpop.permute.xlu0 %1133
        %1135 = vrot.lane.b32.xlu0 %v1124, 12
        %v1136 = vpop.permute.xlu0 %1135
        %1141 = vst.msk [vmem:[#allocation3] sm:$0xf] %vm337, %v1130
        %1142 = vst.msk [vmem:[#allocation3 + $0x4] sm:$0xf] %vm337, %v1132
        %1143 = vst.msk [vmem:[#allocation3 + $0x8] sm:$0xf] %vm337, %v1134
        %1144 = vst.msk [vmem:[#allocation3 + $0xc] sm:$0xf] %vm337, %v1136
        %s1145 = scalar_lea.vmem %s853, 3
        %v1146 = vld [vmem:[%s1145] ss:$4 sm:$0xf]
        %s1147 = scalar_lea.vmem %s853, 99
        %v1148 = vld [vmem:[%s1147] ss:$4 sm:$0xf]
        %s1149 = scalar_lea.vmem %s853, 195
        %v1150 = vld [vmem:[%s1149] ss:$4 sm:$0xf]
        %s1151 = scalar_lea.vmem %s853, 291
        %v1152 = vld [vmem:[%s1151] ss:$4 sm:$0xf]
        %1157 = vrot.lane.b32.xlu0 %v1146, 16
        %v1158 = vpop.permute.xlu0 %1157
        %1159 = vrot.lane.b32.xlu0 %v1148, 16
        %v1160 = vpop.permute.xlu0 %1159
        %1161 = vrot.lane.b32.xlu0 %v1150, 16
        %v1162 = vpop.permute.xlu0 %1161
        %1163 = vrot.lane.b32.xlu0 %v1152, 16
        %v1164 = vpop.permute.xlu0 %1163
        %1169 = vst.msk [vmem:[#allocation3] sm:$0xf] %vm366, %v1158
        %1170 = vst.msk [vmem:[#allocation3 + $0x4] sm:$0xf] %vm366, %v1160
        %1171 = vst.msk [vmem:[#allocation3 + $0x8] sm:$0xf] %vm366, %v1162
        %1172 = vst.msk [vmem:[#allocation3 + $0xc] sm:$0xf] %vm366, %v1164
        %s1173 = scalar_lea.vmem %s853, 4
        %v1174 = vld [vmem:[%s1173] ss:$4 sm:$0xf]
        %s1175 = scalar_lea.vmem %s853, 100
        %v1176 = vld [vmem:[%s1175] ss:$4 sm:$0xf]
        %s1177 = scalar_lea.vmem %s853, 196
        %v1178 = vld [vmem:[%s1177] ss:$4 sm:$0xf]
        %s1179 = scalar_lea.vmem %s853, 292
        %v1180 = vld [vmem:[%s1179] ss:$4 sm:$0xf]
        %1185 = vrot.lane.b32.xlu0 %v1174, 20
        %v1186 = vpop.permute.xlu0 %1185
        %1187 = vrot.lane.b32.xlu0 %v1176, 20
        %v1188 = vpop.permute.xlu0 %1187
        %1189 = vrot.lane.b32.xlu0 %v1178, 20
        %v1190 = vpop.permute.xlu0 %1189
        %1191 = vrot.lane.b32.xlu0 %v1180, 20
        %v1192 = vpop.permute.xlu0 %1191
        %1197 = vst.msk [vmem:[#allocation3] sm:$0xf] %vm395, %v1186
        %1198 = vst.msk [vmem:[#allocation3 + $0x4] sm:$0xf] %vm395, %v1188
        %1199 = vst.msk [vmem:[#allocation3 + $0x8] sm:$0xf] %vm395, %v1190
        %1200 = vst.msk [vmem:[#allocation3 + $0xc] sm:$0xf] %vm395, %v1192
        %v1201 = vld [vmem:[%s993] ss:$4 sm:$0xf]
        %v1202 = vld [vmem:[%s995] ss:$4 sm:$0xf]
        %v1203 = vld [vmem:[%s997] ss:$4 sm:$0xf]
        %v1204 = vld [vmem:[%s999] ss:$4 sm:$0xf]
        %1209 = vrot.lane.b32.xlu0 %v1201, 24
        %v1210 = vpop.permute.xlu0 %1209
        %1211 = vrot.lane.b32.xlu0 %v1202, 24
        %v1212 = vpop.permute.xlu0 %1211
        %1213 = vrot.lane.b32.xlu0 %v1203, 24
        %v1214 = vpop.permute.xlu0 %1213
        %1215 = vrot.lane.b32.xlu0 %v1204, 24
        %v1216 = vpop.permute.xlu0 %1215
        %1221 = vst.msk [vmem:[#allocation3] sm:$0xf] %vm424, %v1210
        %1222 = vst.msk [vmem:[#allocation3 + $0x4] sm:$0xf] %vm424, %v1212
        %1223 = vst.msk [vmem:[#allocation3 + $0x8] sm:$0xf] %vm424, %v1214
        %1224 = vst.msk [vmem:[#allocation3 + $0xc] sm:$0xf] %vm424, %v1216
        %s1225 = scalar_lea.vmem %s937, 3
        %v1226 = vld [vmem:[%s1225] ss:$4 sm:$0xf]
        %s1227 = scalar_lea.vmem %s937, 99
        %v1228 = vld [vmem:[%s1227] ss:$4 sm:$0xf]
        %s1229 = scalar_lea.vmem %s937, 195
        %v1230 = vld [vmem:[%s1229] ss:$4 sm:$0xf]
        %s1231 = scalar_lea.vmem %s937, 291
        %v1232 = vld [vmem:[%s1231] ss:$4 sm:$0xf]
        %1237 = vrot.lane.b32.xlu0 %v1226, 28
        %v1238 = vpop.permute.xlu0 %1237
        %1239 = vrot.lane.b32.xlu0 %v1228, 28
        %v1240 = vpop.permute.xlu0 %1239
        %1241 = vrot.lane.b32.xlu0 %v1230, 28
        %v1242 = vpop.permute.xlu0 %1241
        %1243 = vrot.lane.b32.xlu0 %v1232, 28
        %v1244 = vpop.permute.xlu0 %1243
        %1249 = vst.msk [vmem:[#allocation3] sm:$0xf] %vm453, %v1238
        %1250 = vst.msk [vmem:[#allocation3 + $0x4] sm:$0xf] %vm453, %v1240
        %1251 = vst.msk [vmem:[#allocation3 + $0x8] sm:$0xf] %vm453, %v1242
        %1252 = vst.msk [vmem:[#allocation3 + $0xc] sm:$0xf] %vm453, %v1244
        %s1253 = scalar_lea.vmem %s937, 4
        %v1254 = vld [vmem:[%s1253] ss:$4 sm:$0xf]
        %s1255 = scalar_lea.vmem %s937, 100
        %v1256 = vld [vmem:[%s1255] ss:$4 sm:$0xf]
        %s1257 = scalar_lea.vmem %s937, 196
        %v1258 = vld [vmem:[%s1257] ss:$4 sm:$0xf]
        %s1259 = scalar_lea.vmem %s937, 292
        %v1260 = vld [vmem:[%s1259] ss:$4 sm:$0xf]
        %1265 = vrot.lane.b32.xlu0 %v1254, 32
        %v1266 = vpop.permute.xlu0 %1265
        %1267 = vrot.lane.b32.xlu0 %v1256, 32
        %v1268 = vpop.permute.xlu0 %1267
        %1269 = vrot.lane.b32.xlu0 %v1258, 32
        %v1270 = vpop.permute.xlu0 %1269
        %1271 = vrot.lane.b32.xlu0 %v1260, 32
        %v1272 = vpop.permute.xlu0 %1271
        %1277 = vst.msk [vmem:[#allocation3] sm:$0xf] %vm482, %v1266
        %1278 = vst.msk [vmem:[#allocation3 + $0x4] sm:$0xf] %vm482, %v1268
        %1279 = vst.msk [vmem:[#allocation3 + $0x8] sm:$0xf] %vm482, %v1270
        %1280 = vst.msk [vmem:[#allocation3 + $0xc] sm:$0xf] %vm482, %v1272
        %v1281 = vld [vmem:[#allocation3] sm:$0xf]
        %v1282 = vld [vmem:[#allocation3 + $0x4] sm:$0xf]
        %v1283 = vld [vmem:[#allocation3 + $0x8] sm:$0xf]
        %v1284 = vld [vmem:[#allocation3 + $0xc] sm:$0xf]
        %1289 = vst [vmem:[#allocation1] ss:$2 sm:$0xff] %v1281
        %s1290 = scalar_lea.vmem [#allocation1], 1
        %1291 = vst [vmem:[%s1290] ss:$2 sm:$0xff] %v1282
        %s1292 = scalar_lea.vmem [#allocation1], 16
        %1293 = vst [vmem:[%s1292] ss:$2 sm:$0xff] %v1283
        %s1294 = scalar_lea.vmem [#allocation1], 17
        %1295 = vst [vmem:[%s1294] ss:$2 sm:$0xff] %v1284
        %v1296 = vld.sshfl [vmem:[#allocation1] sm:$0xff pattern:$0x75316420]
        %v1297 = vld.sshfl [vmem:[#allocation1 + $0x10] sm:$0xff pattern:$0x75316420]
        %1300 = vmatpush.msra.mxu0 %v242
        %1301 = vmatpush.msra.mxu0 %v241
        %1302 = vmatpush.msra.mxu0 %v240
        %1303 = vmatpush.msra.mxu0 %v239
        %1304 = vmatpush.msra.mxu0 %v238
        %1305 = vmatpush.msra.mxu0 %v237
        %1306 = vmatpush.msra.mxu0 %v236
        %1307 = vmatpush.msra.mxu0 %v235
        %1308 = vmatpush.msra.mxu0 %v234
        %1309 = vmatpush.msra.mxu0 %v233
        %1310 = vmatpush.msra.mxu0 %v232
        %1311 = vmatpush.msra.mxu0 %v231
        %1312 = vmatpush.msra.mxu0 %v230
        %1313 = vmatpush.msra.mxu0 %v229
        %1314 = vmatpush.msra.mxu0 %v228
        %1315 = vmatpush.msra.mxu0 %v227
        %1316 = vmatmul.f32.gmra.mxu0 %v1296
        %v1317 = vpop.f32.mrf.mxu0
        %v1318 = vadd.f32 0.0, %v1317
        %1319 = vmatmul.f32.gmra.mxu0 %v1297
        %v1320 = vpop.f32.mrf.mxu0
        %v1321 = vadd.f32 0.0, %v1320
        %1322 = vdwg.mxu0
        %v1323 = vmax.f32 %v1063, %v1318
        %v1324 = vmax.f32 %v1064, %v1321
        %v1325 = vld [vmem:[%s2] sm:$0x1]
        %v1327 = vperm.slane %v1325, 0
        %v1329 = vadd.f32 %v1323, %v1327
        %v1330 = vadd.f32 %v1324, %v1327
        %s1331 = scalar_lea.vmem [#allocation2], 32
        %vm1332 = vcmask 61440
        %1333 = vst.msk [vmem:[%s1331] sm:$0x1f] %vm1332, 0.0
        %vm1334 = vcmask 57344
        %1335 = vst.msk [vmem:[#allocation2 + $0x4] sm:$0x1] %vm1334, 0.0
        %1336 = vst.msk [vmem:[#allocation2 + $0xc] sm:$0x1] %vm1334, 0.0
        %1337 = vst.msk [vmem:[#allocation2 + $0x14] sm:$0x1] %vm1334, 0.0
        %1338 = vst.msk [vmem:[#allocation2 + $0x1c] sm:$0x1] %vm1334, 0.0
        %v1340 = vrot.slane %v1329, 4
        %v1343 = vrot.slane %v1330, 4
        %vm1345 = vcmask 60416
        %1346 = vst.msk [vmem:[#allocation2] sm:$0xf] %vm1345, %v1329
        %1347 = vst.msk [vmem:[#allocation2 + $0x8] sm:$0xf] %vm1345, %v1340
        %1348 = vst.msk [vmem:[#allocation2 + $0x10] sm:$0xf] %vm1345, %v1330
        %1349 = vst.msk [vmem:[#allocation2 + $0x18] sm:$0xf] %vm1345, %v1343
        %vm1350 = vcmask 1040960
        %1351 = vst.msk [vmem:[#allocation3] sm:$0x1] %vm1350, 0.0
        %v1352 = vld [vmem:[%s3] sm:$0xff]
        %v1353 = vld [vmem:[%s3 + $0x8] sm:$0xff]
        %v1354 = vld [vmem:[%s3 + $0x10] sm:$0xff]
        %v1355 = vld [vmem:[%s3 + $0x18] sm:$0xff]
        %v1356 = vld [vmem:[%s3 + $0x20] sm:$0xff]
        %v1357 = vld [vmem:[%s3 + $0x28] sm:$0xff]
        %v1358 = vld [vmem:[%s3 + $0x30] sm:$0xff]
        %v1359 = vld [vmem:[%s3 + $0x38] sm:$0xff]
        %v1360 = vld [vmem:[%s3 + $0x40] sm:$0xff]
        %v1361 = vld [vmem:[%s3 + $0x48] sm:$0xff]
        %v1362 = vld [vmem:[%s3 + $0x50] sm:$0xff]
        %v1363 = vld [vmem:[%s3 + $0x58] sm:$0xff]
        %v1364 = vld [vmem:[%s3 + $0x60] sm:$0xff]
        %v1365 = vld [vmem:[%s3 + $0x68] sm:$0xff]
        %v1366 = vld [vmem:[%s3 + $0x70] sm:$0xff]
        %v1367 = vld [vmem:[%s3 + $0x78] sm:$0xff]
        %v1368 = vld [vmem:[#allocation2] ss:$4 sm:$0x1]
        %1369 = vst.msk [vmem:[#allocation3] sm:$0x1] %vm1334, %v1368
        %s1370 = scalar_lea.vmem [#allocation2], 1
        %v1371 = vld [vmem:[%s1370] ss:$4 sm:$0x1]
        %1373 = vrot.lane.b32.xlu0 %v1371, 8
        %v1374 = vpop.permute.xlu0 %1373
        %vm1376 = vcmask 122944
        %1377 = vst.msk [vmem:[#allocation3] sm:$0x1] %vm1376, %v1374
        %s1378 = scalar_lea.vmem [#allocation2], 2
        %v1379 = vld [vmem:[%s1378] ss:$4 sm:$0x1]
        %1381 = vrot.lane.b32.xlu0 %v1379, 16
        %v1382 = vpop.permute.xlu0 %1381
        %vm1384 = vcmask 188544
        %1385 = vst.msk [vmem:[#allocation3] sm:$0x1] %vm1384, %v1382
        %s1386 = scalar_lea.vmem [#allocation2], 8
        %v1387 = vld [vmem:[%s1386] ss:$4 sm:$0x1]
        %1389 = vrot.lane.b32.xlu0 %v1387, 24
        %v1390 = vpop.permute.xlu0 %1389
        %vm1392 = vcmask 254144
        %1393 = vst.msk [vmem:[#allocation3] sm:$0x1] %vm1392, %v1390
        %s1394 = scalar_lea.vmem %s1386, 1 [#allocation2]
        %v1395 = vld [vmem:[%s1394] ss:$4 sm:$0x1]
        %1397 = vrot.lane.b32.xlu0 %v1395, 32
        %v1398 = vpop.permute.xlu0 %1397
        %vm1400 = vcmask 319744
        %1401 = vst.msk [vmem:[#allocation3] sm:$0x1] %vm1400, %v1398
        %s1402 = scalar_lea.vmem %s1386, 2 [#allocation2]
        %v1403 = vld [vmem:[%s1402] ss:$4 sm:$0x1]
        %1405 = vrot.lane.b32.xlu0 %v1403, 40
        %v1406 = vpop.permute.xlu0 %1405
        %vm1408 = vcmask 385344
        %1409 = vst.msk [vmem:[#allocation3] sm:$0x1] %vm1408, %v1406
        %s1410 = scalar_lea.vmem [#allocation2], 16
        %v1411 = vld [vmem:[%s1410] ss:$4 sm:$0x1]
        %1413 = vrot.lane.b32.xlu0 %v1411, 48
        %v1414 = vpop.permute.xlu0 %1413
        %vm1416 = vcmask 450944
        %1417 = vst.msk [vmem:[#allocation3] sm:$0x1] %vm1416, %v1414
        %s1418 = scalar_lea.vmem %s1410, 1 [#allocation2]
        %v1419 = vld [vmem:[%s1418] ss:$4 sm:$0x1]
        %1421 = vrot.lane.b32.xlu0 %v1419, 56
        %v1422 = vpop.permute.xlu0 %1421
        %vm1424 = vcmask 516544
        %1425 = vst.msk [vmem:[#allocation3] sm:$0x1] %vm1424, %v1422
        %s1426 = scalar_lea.vmem %s1410, 2 [#allocation2]
        %v1427 = vld [vmem:[%s1426] ss:$4 sm:$0x1]
        %1429 = vrot.lane.b32.xlu0 %v1427, 64
        %v1430 = vpop.permute.xlu0 %1429
        %vm1432 = vcmask 582144
        %1433 = vst.msk [vmem:[#allocation3] sm:$0x1] %vm1432, %v1430
        %v1434 = vld [vmem:[#allocation3] sm:$0x1]
        %1435 = vmatpush.msra.mxu0 %v1367
        %1436 = vmatpush.msra.mxu0 %v1366
        %1437 = vmatpush.msra.mxu0 %v1365
        %1438 = vmatpush.msra.mxu0 %v1364
        %1439 = vmatpush.msra.mxu0 %v1363
        %1440 = vmatpush.msra.mxu0 %v1362
        %1441 = vmatpush.msra.mxu0 %v1361
        %1442 = vmatpush.msra.mxu0 %v1360
        %1443 = vmatpush.msra.mxu0 %v1359
        %1444 = vmatpush.msra.mxu0 %v1358
        %1445 = vmatpush.msra.mxu0 %v1357
        %1446 = vmatpush.msra.mxu0 %v1356
        %1447 = vmatpush.msra.mxu0 %v1355
        %1448 = vmatpush.msra.mxu0 %v1354
        %1449 = vmatpush.msra.mxu0 %v1353
        %1450 = vmatpush.msra.mxu0 %v1352
        %1451 = vmatmul.f32.gmra.mxu0 %v1434
        %v1452 = vpop.f32.mrf.mxu0
        %v1453 = vadd.f32 0.0, %v1452
        %1454 = vdwg.mxu0
        %v1455 = vld [vmem:[%s1378] ss:$4 sm:$0x1]
        %1456 = vst.msk [vmem:[#allocation3] sm:$0x1] %vm1334, %v1455
        %s1457 = scalar_lea.vmem [#allocation2], 3
        %v1458 = vld [vmem:[%s1457] ss:$4 sm:$0x1]
        %1460 = vrot.lane.b32.xlu0 %v1458, 8
        %v1461 = vpop.permute.xlu0 %1460
        %1463 = vst.msk [vmem:[#allocation3] sm:$0x1] %vm1376, %v1461
        %s1464 = scalar_lea.vmem [#allocation2], 4
        %v1465 = vld [vmem:[%s1464] ss:$4 sm:$0x1]
        %1467 = vrot.lane.b32.xlu0 %v1465, 16
        %v1468 = vpop.permute.xlu0 %1467
        %1470 = vst.msk [vmem:[#allocation3] sm:$0x1] %vm1384, %v1468
        %v1471 = vld [vmem:[%s1402] ss:$4 sm:$0x1]
        %1473 = vrot.lane.b32.xlu0 %v1471, 24
        %v1474 = vpop.permute.xlu0 %1473
        %1476 = vst.msk [vmem:[#allocation3] sm:$0x1] %vm1392, %v1474
        %s1477 = scalar_lea.vmem %s1386, 3 [#allocation2]
        %v1478 = vld [vmem:[%s1477] ss:$4 sm:$0x1]
        %1480 = vrot.lane.b32.xlu0 %v1478, 32
        %v1481 = vpop.permute.xlu0 %1480
        %1483 = vst.msk [vmem:[#allocation3] sm:$0x1] %vm1400, %v1481
        %s1484 = scalar_lea.vmem %s1386, 4 [#allocation2]
        %v1485 = vld [vmem:[%s1484] ss:$4 sm:$0x1]
        %1487 = vrot.lane.b32.xlu0 %v1485, 40
        %v1488 = vpop.permute.xlu0 %1487
        %1490 = vst.msk [vmem:[#allocation3] sm:$0x1] %vm1408, %v1488
        %v1491 = vld [vmem:[%s1426] ss:$4 sm:$0x1]
        %1493 = vrot.lane.b32.xlu0 %v1491, 48
        %v1494 = vpop.permute.xlu0 %1493
        %1496 = vst.msk [vmem:[#allocation3] sm:$0x1] %vm1416, %v1494
        %s1497 = scalar_lea.vmem %s1410, 3 [#allocation2]
        %v1498 = vld [vmem:[%s1497] ss:$4 sm:$0x1]
        %1500 = vrot.lane.b32.xlu0 %v1498, 56
        %v1501 = vpop.permute.xlu0 %1500
        %1503 = vst.msk [vmem:[#allocation3] sm:$0x1] %vm1424, %v1501
        %s1504 = scalar_lea.vmem %s1410, 4 [#allocation2]
        %v1505 = vld [vmem:[%s1504] ss:$4 sm:$0x1]
        %1507 = vrot.lane.b32.xlu0 %v1505, 64
        %v1508 = vpop.permute.xlu0 %1507
        %1510 = vst.msk [vmem:[#allocation3] sm:$0x1] %vm1432, %v1508
        %v1511 = vld [vmem:[#allocation3] sm:$0x1]
        %1512 = vmatpush.msra.mxu0 %v1367
        %1513 = vmatpush.msra.mxu0 %v1366
        %1514 = vmatpush.msra.mxu0 %v1365
        %1515 = vmatpush.msra.mxu0 %v1364
        %1516 = vmatpush.msra.mxu0 %v1363
        %1517 = vmatpush.msra.mxu0 %v1362
        %1518 = vmatpush.msra.mxu0 %v1361
        %1519 = vmatpush.msra.mxu0 %v1360
        %1520 = vmatpush.msra.mxu0 %v1359
        %1521 = vmatpush.msra.mxu0 %v1358
        %1522 = vmatpush.msra.mxu0 %v1357
        %1523 = vmatpush.msra.mxu0 %v1356
        %1524 = vmatpush.msra.mxu0 %v1355
        %1525 = vmatpush.msra.mxu0 %v1354
        %1526 = vmatpush.msra.mxu0 %v1353
        %1527 = vmatpush.msra.mxu0 %v1352
        %1528 = vmatmul.f32.gmra.mxu0 %v1511
        %v1529 = vpop.f32.mrf.mxu0
        %v1530 = vadd.f32 0.0, %v1529
        %1531 = vdwg.mxu0
        %v1532 = vmax.f32 %v1453, %v1530
        %v1533 = vld [vmem:[%s1410] ss:$4 sm:$0x1]
        %1534 = vst.msk [vmem:[#allocation3] sm:$0x1] %vm1334, %v1533
        %v1535 = vld [vmem:[%s1418] ss:$4 sm:$0x1]
        %1537 = vrot.lane.b32.xlu0 %v1535, 8
        %v1538 = vpop.permute.xlu0 %1537
        %1540 = vst.msk [vmem:[#allocation3] sm:$0x1] %vm1376, %v1538
        %v1541 = vld [vmem:[%s1426] ss:$4 sm:$0x1]
        %1543 = vrot.lane.b32.xlu0 %v1541, 16
        %v1544 = vpop.permute.xlu0 %1543
        %1546 = vst.msk [vmem:[#allocation3] sm:$0x1] %vm1384, %v1544
        %s1547 = scalar_lea.vmem [#allocation2], 24
        %v1548 = vld [vmem:[%s1547] ss:$4 sm:$0x1]
        %1550 = vrot.lane.b32.xlu0 %v1548, 24
        %v1551 = vpop.permute.xlu0 %1550
        %1553 = vst.msk [vmem:[#allocation3] sm:$0x1] %vm1392, %v1551
        %s1554 = scalar_lea.vmem %s1547, 1 [#allocation2]
        %v1555 = vld [vmem:[%s1554] ss:$4 sm:$0x1]
        %1557 = vrot.lane.b32.xlu0 %v1555, 32
        %v1558 = vpop.permute.xlu0 %1557
        %1560 = vst.msk [vmem:[#allocation3] sm:$0x1] %vm1400, %v1558
        %s1561 = scalar_lea.vmem %s1547, 2 [#allocation2]
        %v1562 = vld [vmem:[%s1561] ss:$4 sm:$0x1]
        %1564 = vrot.lane.b32.xlu0 %v1562, 40
        %v1565 = vpop.permute.xlu0 %1564
        %1567 = vst.msk [vmem:[#allocation3] sm:$0x1] %vm1408, %v1565
        %v1568 = vld [vmem:[%s1331] ss:$4 sm:$0x1]
        %1570 = vrot.lane.b32.xlu0 %v1568, 48
        %v1571 = vpop.permute.xlu0 %1570
        %1573 = vst.msk [vmem:[#allocation3] sm:$0x1] %vm1416, %v1571
        %s1574 = scalar_lea.vmem %s1331, 1 [#allocation2]
        %v1575 = vld [vmem:[%s1574] ss:$4 sm:$0x1]
        %1577 = vrot.lane.b32.xlu0 %v1575, 56
        %v1578 = vpop.permute.xlu0 %1577
        %1580 = vst.msk [vmem:[#allocation3] sm:$0x1] %vm1424, %v1578
        %s1581 = scalar_lea.vmem %s1331, 2 [#allocation2]
        %v1582 = vld [vmem:[%s1581] ss:$4 sm:$0x1]
        %1584 = vrot.lane.b32.xlu0 %v1582, 64
        %v1585 = vpop.permute.xlu0 %1584
        %1587 = vst.msk [vmem:[#allocation3] sm:$0x1] %vm1432, %v1585
        %v1588 = vld [vmem:[#allocation3] sm:$0x1]
        %1589 = vmatpush.msra.mxu0 %v1367
        %1590 = vmatpush.msra.mxu0 %v1366
        %1591 = vmatpush.msra.mxu0 %v1365
        %1592 = vmatpush.msra.mxu0 %v1364
        %1593 = vmatpush.msra.mxu0 %v1363
        %1594 = vmatpush.msra.mxu0 %v1362
        %1595 = vmatpush.msra.mxu0 %v1361
        %1596 = vmatpush.msra.mxu0 %v1360
        %1597 = vmatpush.msra.mxu0 %v1359
        %1598 = vmatpush.msra.mxu0 %v1358
        %1599 = vmatpush.msra.mxu0 %v1357
        %1600 = vmatpush.msra.mxu0 %v1356
        %1601 = vmatpush.msra.mxu0 %v1355
        %1602 = vmatpush.msra.mxu0 %v1354
        %1603 = vmatpush.msra.mxu0 %v1353
        %1604 = vmatpush.msra.mxu0 %v1352
        %1605 = vmatmul.f32.gmra.mxu0 %v1588
        %v1606 = vpop.f32.mrf.mxu0
        %v1607 = vadd.f32 0.0, %v1606
        %1608 = vdwg.mxu0
        %v1609 = vmax.f32 %v1532, %v1607
        %v1610 = vld [vmem:[%s1426] ss:$4 sm:$0x1]
        %1611 = vst.msk [vmem:[#allocation3] sm:$0x1] %vm1334, %v1610
        %v1612 = vld [vmem:[%s1497] ss:$4 sm:$0x1]
        %1614 = vrot.lane.b32.xlu0 %v1612, 8
        %v1615 = vpop.permute.xlu0 %1614
        %1617 = vst.msk [vmem:[#allocation3] sm:$0x1] %vm1376, %v1615
        %v1618 = vld [vmem:[%s1504] ss:$4 sm:$0x1]
        %1620 = vrot.lane.b32.xlu0 %v1618, 16
        %v1621 = vpop.permute.xlu0 %1620
        %1623 = vst.msk [vmem:[#allocation3] sm:$0x1] %vm1384, %v1621
        %v1624 = vld [vmem:[%s1561] ss:$4 sm:$0x1]
        %1626 = vrot.lane.b32.xlu0 %v1624, 24
        %v1627 = vpop.permute.xlu0 %1626
        %1629 = vst.msk [vmem:[#allocation3] sm:$0x1] %vm1392, %v1627
        %s1630 = scalar_lea.vmem %s1547, 3 [#allocation2]
        %v1631 = vld [vmem:[%s1630] ss:$4 sm:$0x1]
        %1633 = vrot.lane.b32.xlu0 %v1631, 32
        %v1634 = vpop.permute.xlu0 %1633
        %1636 = vst.msk [vmem:[#allocation3] sm:$0x1] %vm1400, %v1634
        %s1637 = scalar_lea.vmem %s1547, 4 [#allocation2]
        %v1638 = vld [vmem:[%s1637] ss:$4 sm:$0x1]
        %1640 = vrot.lane.b32.xlu0 %v1638, 40
        %v1641 = vpop.permute.xlu0 %1640
        %1643 = vst.msk [vmem:[#allocation3] sm:$0x1] %vm1408, %v1641
        %v1644 = vld [vmem:[%s1581] ss:$4 sm:$0x1]
        %1646 = vrot.lane.b32.xlu0 %v1644, 48
        %v1647 = vpop.permute.xlu0 %1646
        %1649 = vst.msk [vmem:[#allocation3] sm:$0x1] %vm1416, %v1647
        %s1650 = scalar_lea.vmem %s1331, 3 [#allocation2]
        %v1651 = vld [vmem:[%s1650] ss:$4 sm:$0x1]
        %1653 = vrot.lane.b32.xlu0 %v1651, 56
        %v1654 = vpop.permute.xlu0 %1653
        %1656 = vst.msk [vmem:[#allocation3] sm:$0x1] %vm1424, %v1654
        %s1657 = scalar_lea.vmem %s1331, 4 [#allocation2]
        %v1658 = vld [vmem:[%s1657] ss:$4 sm:$0x1]
        %1660 = vrot.lane.b32.xlu0 %v1658, 64
        %v1661 = vpop.permute.xlu0 %1660
        %1663 = vst.msk [vmem:[#allocation3] sm:$0x1] %vm1432, %v1661
        %v1664 = vld [vmem:[#allocation3] sm:$0x1]
        %1665 = vmatpush.msra.mxu0 %v1367
        %1666 = vmatpush.msra.mxu0 %v1366
        %1667 = vmatpush.msra.mxu0 %v1365
        %1668 = vmatpush.msra.mxu0 %v1364
        %1669 = vmatpush.msra.mxu0 %v1363
        %1670 = vmatpush.msra.mxu0 %v1362
        %1671 = vmatpush.msra.mxu0 %v1361
        %1672 = vmatpush.msra.mxu0 %v1360
        %1673 = vmatpush.msra.mxu0 %v1359
        %1674 = vmatpush.msra.mxu0 %v1358
        %1675 = vmatpush.msra.mxu0 %v1357
        %1676 = vmatpush.msra.mxu0 %v1356
        %1677 = vmatpush.msra.mxu0 %v1355
        %1678 = vmatpush.msra.mxu0 %v1354
        %1679 = vmatpush.msra.mxu0 %v1353
        %1680 = vmatpush.msra.mxu0 %v1352
        %1681 = vmatmul.f32.gmra.mxu0 %v1664
        %v1682 = vpop.f32.mrf.mxu0
        %v1683 = vadd.f32 0.0, %v1682
        %1684 = vdwg.mxu0
        %v1685 = vmax.f32 %v1609, %v1683
        %v1686 = vld [vmem:[%s4] sm:$0x1]
        %v1687 = vadd.f32 %v1685, %v1686
        %vm1688 = vcmask 122880
        %1689 = vst.msk [vmem:[%s216] sm:$0x1] %vm1688, %v1687
        %s1690 = sand.u32 %s137, 1
        %s1691 = scalar_lea.sflag [#allocation5], %s1690
        %s1692 = sand.u32 %s137, 1
        %s1693 = scalar_lea.vmem [#allocation4], %s1692
        // Predicated region
        $region41: #{tpu_custom_call.1} parent=39 // pred_check
          %p1694 = pneg %p147
        $region42: #{tpu_custom_call.1} parent=39 // pred_check_branch
          %1696 = sbr.rel (%p1694) target = $region44
        $region43: #{tpu_custom_call.1} parent=39 // pred_region
          %1698 = vsyncadd %s1691, 0
          %s1699 = scalar_lea.hbm %s5, %s19
          %s1701 = sshll.u32 %s1693, 4
          %s1702 = int_to_ptr.vmem [resolvable:$true] %s1701
          %s1703 = sshll.u32 %s1699, 4
          %s1704 = int_to_ptr.hbm [resolvable:$true] %s1703
          %1706 = dma.vmem_to_hbm [thread:$0]  %s1702, 16, %s1704, %s1691
        $region44: #{tpu_custom_call.1} parent=39 // pred_fallthru
          _
      $region40: #{tpu_custom_call.1} parent=5 // pred_fallthru
        _
      %p1707 = scmp.le.s32.totalorder 2, %s14
      // Predicated region
      $region45: #{tpu_custom_call.1} parent=5 // pred_check
        %p1708 = pneg %p1707
      $region46: #{tpu_custom_call.1} parent=5 // pred_check_branch
        %1710 = sbr.rel (%p1708) target = $region48
      $region47: #{tpu_custom_call.1} parent=5 // pred_region
        %s1711 = ssub.s32 %s14, 2
        // Predicated region
        $region49: #{tpu_custom_call.1} parent=47 // pred_check
          %p1712 = pneg %p153
        $region50: #{tpu_custom_call.1} parent=47 // pred_check_branch
          %1714 = sbr.rel (%p1712) target = $region52
        $region51: #{tpu_custom_call.1} parent=47 // pred_region
          %s1715 = sand.u32 %s138, 1
          %s1716 = scalar_lea.sflag [#allocation5], %s1715
          %s1717 = sand.u32 %s138, 1
          %s1718 = scalar_lea.vmem [#allocation4], %s1717
          %1720 = dma.done %s1716, 16
        $region52: #{tpu_custom_call.1} parent=47 // pred_fallthru
          _
      $region48: #{tpu_custom_call.1} parent=5 // pred_fallthru
        _
    $region6: #{tpu_custom_call.1} parent=1 // loop_footer
      %s18 = sadd.s32 1, %s14
    $region7: #{tpu_custom_call.1} parent=1 // loop_footer_branch
      %13 = sbr.rel target = $region3
    $region8: #{tpu_custom_call.1} parent=1 // loop_exit
      _
    %1721 = vsyncpa [#allocation5], 1
    %s1722 = scalar_lea.sflag [#allocation5], 1
    %1723 = vsyncpa %s1722, 1

</llo_original>
